<compile_context>
chip_gen: v7x
topology: tpu7x:2x2x1
jax: 0.10.0
libtpu: 0.0.40
codegen_flags: <defaults>
</compile_context>

<pallas_src>
import math

import jax
import jax.numpy as jnp
import numpy as np
from jax.experimental import pallas as pl
from jax.experimental.pallas import tpu as pltpu

SEQ = 8        # L
BATCH = 2      # N
D_MODEL = 32   # d_model
N_HEAD = 4     # n_head
HEAD_DIM = D_MODEL // N_HEAD
EPS = 1e-5
NEG_INF = -1e9

PARAM_ORDER = (
    "ln1_g", "ln1_b",
    "w_q", "w_k", "w_v", "b_q", "b_k", "b_v",
    "w_out", "b_out",
    "ln2_g", "ln2_b",
    "w_fc", "b_fc", "w_proj", "b_proj",
)


def _layernorm(v, g, b):
    # fp32 layernorm (matches the LayerNorm subclass that casts to float32).
    mu = jnp.mean(v, axis=-1, keepdims=True)
    var = jnp.mean((v - mu) ** 2, axis=-1, keepdims=True)
    return (v - mu) * jax.lax.rsqrt(var + EPS) * g + b


def _split_bh(t, tb, seq, n_head, head_dim):
    # (TB*L, H*dh) -> (TB*H, L, dh), batch-major / head-minor.
    # TODO(synk): with a newer Mosaic, a lane-layout-aware
    # pltpu.einshape would avoid the per-head lane slices here.
    return jnp.stack(
        [t[b * seq:(b + 1) * seq, h * head_dim:(h + 1) * head_dim]
         for b in range(tb) for h in range(n_head)], axis=0)


def _merge_bh(o, tb, n_head):
    # (TB*H, L, dh) -> (TB*L, H*dh)
    return jnp.concatenate(
        [jnp.concatenate([o[b * n_head + h] for h in range(n_head)], axis=-1)
         for b in range(tb)], axis=0)


def rab_kernel(x_ref, mask_ref,
               ln1_g_ref, ln1_b_ref,
               wq_ref, wk_ref, wv_ref, bq_ref, bk_ref, bv_ref,
               wo_ref, bo_ref,
               ln2_g_ref, ln2_b_ref,
               wfc_ref, bfc_ref, wproj_ref, bproj_ref,
               out_ref):
    R, D = x_ref.shape                       # R = TB * L rows (batch-major)
    H = N_HEAD
    TB = mask_ref.shape[0] // H
    L = R // TB
    dh = D // H
    scale = 1.0 / math.sqrt(dh)
    bf16 = jnp.bfloat16

    x = x_ref[...].astype(jnp.float32)       # residual path stays f32

    # ---------------- x = x + attn(ln_1(x)) ---------------------------------
    xn = _layernorm(x, ln1_g_ref[...], ln1_b_ref[...])
    xn16 = xn.astype(bf16)

    q = jnp.dot(xn16, wq_ref[...], preferred_element_type=jnp.float32) + bq_ref[...]
    k = jnp.dot(xn16, wk_ref[...], preferred_element_type=jnp.float32) + bk_ref[...]
    v = jnp.dot(xn16, wv_ref[...], preferred_element_type=jnp.float32) + bv_ref[...]
    q = (q * scale).astype(bf16)
    k = k.astype(bf16)
    v = v.astype(bf16)

    # (TB*H, L, dh) slabs, batch-major / head-minor (matches mask layout).
    qh = _split_bh(q, TB, L, H, dh)
    kh = _split_bh(k, TB, L, H, dh)
    vh = _split_bh(v, TB, L, H, dh)

    # One pair of head+batch-batched contractions (flash-attention einsum form).
    s = jnp.einsum("bqd,bkd->bqk", qh, kh,
                   preferred_element_type=jnp.float32)       # (TB*H, L, L)
    s = s + mask_ref[...]                                    # (TB*H, 1, L) key mask
    s = s - jnp.max(s, axis=-1, keepdims=True)
    p = jnp.exp(s)
    p = p * pl.reciprocal(jnp.sum(p, axis=-1, keepdims=True), approx=True)
    o = jnp.einsum("bqk,bkd->bqd", p.astype(bf16), vh,
                   preferred_element_type=jnp.float32)       # (TB*H, L, dh)

    attn = _merge_bh(o, TB, H)                               # (R, D) f32
    attn = jnp.dot(attn.astype(bf16), wo_ref[...],
                   preferred_element_type=jnp.float32) + bo_ref[...]
    x = x + attn

    # ---------------- x = x + mlp(ln_2(x)) -----------------------------------
    xn2 = _layernorm(x, ln2_g_ref[...], ln2_b_ref[...])
    h = jnp.dot(xn2.astype(bf16), wfc_ref[...],
                preferred_element_type=jnp.float32) + bfc_ref[...]
    h = h * jax.nn.sigmoid(1.702 * h)        # QuickGELU (f32, sigmoid on EUP)
    mlp = jnp.dot(h.astype(bf16), wproj_ref[...],
                  preferred_element_type=jnp.float32) + bproj_ref[...]

    out_ref[...] = (x + mlp).astype(out_ref.dtype)


def _pick_batch_block(n_batch, seq_len, target_rows=128, max_rows=1024):
    divisors = [d for d in range(1, n_batch + 1)
                if n_batch % d == 0 and d * seq_len <= max_rows]
    if not divisors:
        divisors = [1]
    # Prefer the smallest block that reaches ~target_rows MXU rows while still
    # leaving >= 2 grid steps (keeps both TensorCores busy on megacore parts).
    for d in divisors:
        if d * seq_len >= target_rows and n_batch // d >= 2:
            return d
    # Otherwise take the largest affordable block: row batching is the main
    # throughput lever at small batch.
    return max(divisors)


def residual_attention_block(x_lnd, padding_mask, params):
    """x_lnd: (L, N, D) float32, padding_mask: (N, L) bool (True = masked)."""
    L, N, D = x_lnd.shape
    TB = _pick_batch_block(N, L)
    if (TB * L) % 8 != 0:
        TB = N                       # full block: row dim equals the array dim

    # Rearrange once in the XLA wrapper to batch-major rows so every in-kernel
    # matmul sees a dense (TB*L, D) slab and per-sequence rows are contiguous.
    x_rows = jnp.transpose(x_lnd, (1, 0, 2)).reshape(N * L, D)

    # Additive key mask, pre-expanded per (sequence, head) -> (N*H, 1, L) so the
    # kernel's mask add is one broadcast over the whole (TB*H, L, L) score slab.
    add_mask = jnp.where(padding_mask, NEG_INF, 0.0).astype(jnp.float32)   # (N, L)
    add_mask = jnp.broadcast_to(add_mask[:, None, :], (N, N_HEAD, L))
    add_mask = add_mask.reshape(N * N_HEAD, 1, L)

    rows_per_step = TB * L
    grid = (N // TB,)

    param_args = [params[name] for name in PARAM_ORDER]
    param_specs = [
        pl.BlockSpec(params[name].shape, lambda i: (0, 0)) for name in PARAM_ORDER
    ]
    # TODO(synk): at real CLIP widths (D >= 512), single-buffer the weight
    # blocks (pl.Buffered(1)) and set vmem_limit_bytes for v7x's 64 MiB VMEM;
    # the lane-dense-output concern also disappears once D >= 128.

    out_rows = pl.pallas_call(
        rab_kernel,
        out_shape=jax.ShapeDtypeStruct((N * L, D), x_lnd.dtype),
        grid_spec=pltpu.PrefetchScalarGridSpec(
            num_scalar_prefetch=0,
            grid=grid,
            in_specs=[
                pl.BlockSpec((rows_per_step, D), lambda i: (i, 0)),      # x rows
                pl.BlockSpec((TB * N_HEAD, 1, L), lambda i: (i, 0, 0)),  # key mask
            ] + param_specs,
            out_specs=pl.BlockSpec((rows_per_step, D), lambda i: (i, 0)),
        ),
        compiler_params=pltpu.CompilerParams(
            dimension_semantics=("parallel",)),
    )(x_rows, add_mask, *param_args)

    return jnp.transpose(out_rows.reshape(N, L, D), (1, 0, 2))   # back to (L, N, D)


def reference_block(x_lnd, padding_mask, params):
    """Pure-JAX (non-Pallas) mirror of PyTorch ResidualAttentionBlock.forward."""
    x = x_lnd.astype(jnp.float32)
    L, N, D = x.shape
    H, dh = N_HEAD, D // N_HEAD
    f32 = lambda a: a.astype(jnp.float32)

    def ln(v, g, b):
        mu = jnp.mean(v, axis=-1, keepdims=True)
        var = jnp.mean((v - mu) ** 2, axis=-1, keepdims=True)
        return (v - mu) * jax.lax.rsqrt(var + EPS) * g[0] + b[0]

    xn = ln(x, params["ln1_g"], params["ln1_b"])
    q = jnp.einsum("lnd,de->lne", xn, f32(params["w_q"])) + params["b_q"][0]
    k = jnp.einsum("lnd,de->lne", xn, f32(params["w_k"])) + params["b_k"][0]
    v = jnp.einsum("lnd,de->lne", xn, f32(params["w_v"])) + params["b_v"][0]

    def split(t):  # (L, N, D) -> (N, H, L, dh)
        return jnp.transpose(t.reshape(L, N, H, dh), (1, 2, 0, 3))

    qh, kh, vh = split(q), split(k), split(v)
    s = jnp.einsum("nhld,nhmd->nhlm", qh, kh) / math.sqrt(dh)
    s = s + jnp.where(padding_mask, NEG_INF, 0.0)[:, None, None, :]
    p = jax.nn.softmax(s, axis=-1)
    o = jnp.einsum("nhlm,nhmd->nhld", p, vh)
    o = jnp.transpose(o, (2, 0, 1, 3)).reshape(L, N, D)
    attn = jnp.einsum("lnd,de->lne", o, f32(params["w_out"])) + params["b_out"][0]
    x = x + attn

    xn2 = ln(x, params["ln2_g"], params["ln2_b"])
    h = jnp.einsum("lnd,de->lne", xn2, f32(params["w_fc"])) + params["b_fc"][0]
    h = h * jax.nn.sigmoid(1.702 * h)
    mlp = jnp.einsum("lne,ed->lnd", h, f32(params["w_proj"])) + params["b_proj"][0]
    return x + mlp


def init_params(key, d_model):
    ks = jax.random.split(key, 10)
    std = 0.02

    def w(k, shape):
        # MXU inputs are bf16 (f32 accumulation); storing weights in bf16
        # halves the per-step weight DMA.
        return (std * jax.random.normal(k, shape, jnp.float32)).astype(jnp.bfloat16)

    return {
        "ln1_g": jnp.ones((1, d_model), jnp.float32),
        "ln1_b": jnp.zeros((1, d_model), jnp.float32),
        "w_q": w(ks[0], (d_model, d_model)),
        "w_k": w(ks[1], (d_model, d_model)),
        "w_v": w(ks[2], (d_model, d_model)),
        "b_q": std * jax.random.normal(ks[3], (1, d_model), jnp.float32),
        "b_k": std * jax.random.normal(ks[4], (1, d_model), jnp.float32),
        "b_v": std * jax.random.normal(ks[5], (1, d_model), jnp.float32),
        "w_out": w(ks[6], (d_model, d_model)),
        "b_out": jnp.zeros((1, d_model), jnp.float32),
        "ln2_g": jnp.ones((1, d_model), jnp.float32),
        "ln2_b": jnp.zeros((1, d_model), jnp.float32),
        "w_fc": w(ks[7], (d_model, 4 * d_model)),
        "b_fc": std * jax.random.normal(ks[8], (1, 4 * d_model), jnp.float32),
        "w_proj": w(ks[9], (4 * d_model, d_model)),
        "b_proj": jnp.zeros((1, d_model), jnp.float32),
    }


if __name__ == "__main__":
    key = jax.random.PRNGKey(0)
    kx, kp = jax.random.split(key)

    x = jax.random.normal(kx, (SEQ, BATCH, D_MODEL), jnp.float32)   # (L, N, D)
    # key_padding_mask: mask out the last two positions of batch element 1
    padding_mask = jnp.zeros((BATCH, SEQ), dtype=bool)
    padding_mask = padding_mask.at[1, SEQ - 2:].set(True)

    params = init_params(kp, D_MODEL)

    out = residual_attention_block(x, padding_mask, params)
    out = jax.block_until_ready(out)

    ref = jax.block_until_ready(reference_block(x, padding_mask, params))
    # bf16 MXU inputs (f32 accumulation) vs. the all-f32 reference.
    np.testing.assert_allclose(np.asarray(out), np.asarray(ref),
                               rtol=2e-3, atol=2e-3)

    print("KERNEL_OK")
</pallas_src>

<mosaic_0001>
module attributes {stable_mosaic.version = 11 : i64} {
  func.func @rab_kernel(%arg0: i32, %arg1: memref<16x32xf32, #tpu.memory_space<vmem>>, %arg2: memref<8x1x8xf32, #tpu.memory_space<vmem>>, %arg3: memref<1x32xf32, #tpu.memory_space<vmem>>, %arg4: memref<1x32xf32, #tpu.memory_space<vmem>>, %arg5: memref<32x32xbf16, #tpu.memory_space<vmem>>, %arg6: memref<32x32xbf16, #tpu.memory_space<vmem>>, %arg7: memref<32x32xbf16, #tpu.memory_space<vmem>>, %arg8: memref<1x32xf32, #tpu.memory_space<vmem>>, %arg9: memref<1x32xf32, #tpu.memory_space<vmem>>, %arg10: memref<1x32xf32, #tpu.memory_space<vmem>>, %arg11: memref<32x32xbf16, #tpu.memory_space<vmem>>, %arg12: memref<1x32xf32, #tpu.memory_space<vmem>>, %arg13: memref<1x32xf32, #tpu.memory_space<vmem>>, %arg14: memref<1x32xf32, #tpu.memory_space<vmem>>, %arg15: memref<32x128xbf16, #tpu.memory_space<vmem>>, %arg16: memref<1x128xf32, #tpu.memory_space<vmem>>, %arg17: memref<128x32xbf16, #tpu.memory_space<vmem>>, %arg18: memref<1x32xf32, #tpu.memory_space<vmem>>, %arg19: memref<16x32xf32, #tpu.memory_space<vmem>>) attributes {dimension_semantics = [#tpu.dimension_semantics<parallel>], iteration_bounds = array<i64: 1>, scalar_prefetch = 0 : i64, scratch_operands = 0 : i64, tpu.core_type = #tpu.core_type<tc>, window_params = [{transform_indices = @transform_0, window_bounds = array<i64: 16, 32>}, {transform_indices = @transform_1, window_bounds = array<i64: 8, 1, 8>}, {pipeline_mode = #tpu.pipeline_mode<synchronous>, transform_indices = @transform_2, window_bounds = array<i64: 1, 32>}, {pipeline_mode = #tpu.pipeline_mode<synchronous>, transform_indices = @transform_3, window_bounds = array<i64: 1, 32>}, {pipeline_mode = #tpu.pipeline_mode<synchronous>, transform_indices = @transform_4, window_bounds = array<i64: 32, 32>}, {pipeline_mode = #tpu.pipeline_mode<synchronous>, transform_indices = @transform_5, window_bounds = array<i64: 32, 32>}, {pipeline_mode = #tpu.pipeline_mode<synchronous>, transform_indices = @transform_6, window_bounds = array<i64: 32, 32>}, {pipeline_mode = #tpu.pipeline_mode<synchronous>, transform_indices = @transform_7, window_bounds = array<i64: 1, 32>}, {pipeline_mode = #tpu.pipeline_mode<synchronous>, transform_indices = @transform_8, window_bounds = array<i64: 1, 32>}, {pipeline_mode = #tpu.pipeline_mode<synchronous>, transform_indices = @transform_9, window_bounds = array<i64: 1, 32>}, {pipeline_mode = #tpu.pipeline_mode<synchronous>, transform_indices = @transform_10, window_bounds = array<i64: 32, 32>}, {pipeline_mode = #tpu.pipeline_mode<synchronous>, transform_indices = @transform_11, window_bounds = array<i64: 1, 32>}, {pipeline_mode = #tpu.pipeline_mode<synchronous>, transform_indices = @transform_12, window_bounds = array<i64: 1, 32>}, {pipeline_mode = #tpu.pipeline_mode<synchronous>, transform_indices = @transform_13, window_bounds = array<i64: 1, 32>}, {pipeline_mode = #tpu.pipeline_mode<synchronous>, transform_indices = @transform_14, window_bounds = array<i64: 32, 128>}, {pipeline_mode = #tpu.pipeline_mode<synchronous>, transform_indices = @transform_15, window_bounds = array<i64: 1, 128>}, {pipeline_mode = #tpu.pipeline_mode<synchronous>, transform_indices = @transform_16, window_bounds = array<i64: 128, 32>}, {pipeline_mode = #tpu.pipeline_mode<synchronous>, transform_indices = @transform_17, window_bounds = array<i64: 1, 32>}, {transform_indices = @transform_18, window_bounds = array<i64: 16, 32>}]} {
    %c0 = arith.constant 0 : index
    %c0_0 = arith.constant 0 : index
    %0 = vector.load %arg1[%c0, %c0_0] : memref<16x32xf32, #tpu.memory_space<vmem>>, vector<16x32xf32>
    %c0_1 = arith.constant 0 : index
    %c0_2 = arith.constant 0 : index
    %1 = vector.load %arg3[%c0_1, %c0_2] : memref<1x32xf32, #tpu.memory_space<vmem>>, vector<1x32xf32>
    %c0_3 = arith.constant 0 : index
    %c0_4 = arith.constant 0 : index
    %2 = vector.load %arg4[%c0_3, %c0_4] : memref<1x32xf32, #tpu.memory_space<vmem>>, vector<1x32xf32>
    %cst = arith.constant dense<0.000000e+00> : vector<16xf32>
    %3 = vector.multi_reduction <add>, %0, %cst [1] : vector<16x32xf32> to vector<16xf32>
    %4 = vector.shape_cast %3 : vector<16xf32> to vector<16x1xf32>
    %cst_5 = arith.constant 3.200000e+01 : f32
    %5 = vector.broadcast %cst_5 : f32 to vector<16x1xf32>
    %6 = arith.divf %4, %5 : vector<16x1xf32>
    %7 = vector.broadcast %6 : vector<16x1xf32> to vector<16x32xf32>
    %8 = arith.subf %0, %7 : vector<16x32xf32>
    %9 = arith.mulf %8, %8 : vector<16x32xf32>
    %cst_6 = arith.constant dense<0.000000e+00> : vector<16xf32>
    %10 = vector.multi_reduction <add>, %9, %cst_6 [1] : vector<16x32xf32> to vector<16xf32>
    %11 = vector.shape_cast %10 : vector<16xf32> to vector<16x1xf32>
    %cst_7 = arith.constant 3.200000e+01 : f32
    %12 = vector.broadcast %cst_7 : f32 to vector<16x1xf32>
    %13 = arith.divf %11, %12 : vector<16x1xf32>
    %14 = vector.broadcast %6 : vector<16x1xf32> to vector<16x32xf32>
    %15 = arith.subf %0, %14 : vector<16x32xf32>
    %cst_8 = arith.constant 9.99999974E-6 : f32
    %16 = vector.broadcast %cst_8 : f32 to vector<16x1xf32>
    %17 = arith.addf %13, %16 : vector<16x1xf32>
    %18 = math.rsqrt %17 : vector<16x1xf32>
    %19 = vector.broadcast %18 : vector<16x1xf32> to vector<16x32xf32>
    %20 = arith.mulf %15, %19 : vector<16x32xf32>
    %21 = vector.broadcast %1 : vector<1x32xf32> to vector<16x32xf32>
    %22 = arith.mulf %20, %21 : vector<16x32xf32>
    %23 = vector.broadcast %2 : vector<1x32xf32> to vector<16x32xf32>
    %24 = arith.addf %22, %23 : vector<16x32xf32>
    %25 = arith.truncf %24 : vector<16x32xf32> to vector<16x32xbf16>
    %c0_9 = arith.constant 0 : index
    %c0_10 = arith.constant 0 : index
    %26 = vector.load %arg5[%c0_9, %c0_10] : memref<32x32xbf16, #tpu.memory_space<vmem>>, vector<32x32xbf16>
    %cst_11 = arith.constant dense<0.000000e+00> : vector<16x32xf32>
    %27 = tpu.matmul %25, %26, %cst_11 {dimension_numbers = #tpu.dot_dimension_numbers<[1], [0], [0], [1], [0, 0, 1, 1], [], []>} : vector<16x32xbf16>, vector<32x32xbf16>, vector<16x32xf32> -> vector<16x32xf32>
    %c0_12 = arith.constant 0 : index
    %c0_13 = arith.constant 0 : index
    %28 = vector.load %arg8[%c0_12, %c0_13] : memref<1x32xf32, #tpu.memory_space<vmem>>, vector<1x32xf32>
    %29 = vector.broadcast %28 : vector<1x32xf32> to vector<16x32xf32>
    %30 = arith.addf %27, %29 : vector<16x32xf32>
    %c0_14 = arith.constant 0 : index
    %c0_15 = arith.constant 0 : index
    %31 = vector.load %arg6[%c0_14, %c0_15] : memref<32x32xbf16, #tpu.memory_space<vmem>>, vector<32x32xbf16>
    %cst_16 = arith.constant dense<0.000000e+00> : vector<16x32xf32>
    %32 = tpu.matmul %25, %31, %cst_16 {dimension_numbers = #tpu.dot_dimension_numbers<[1], [0], [0], [1], [0, 0, 1, 1], [], []>} : vector<16x32xbf16>, vector<32x32xbf16>, vector<16x32xf32> -> vector<16x32xf32>
    %c0_17 = arith.constant 0 : index
    %c0_18 = arith.constant 0 : index
    %33 = vector.load %arg9[%c0_17, %c0_18] : memref<1x32xf32, #tpu.memory_space<vmem>>, vector<1x32xf32>
    %34 = vector.broadcast %33 : vector<1x32xf32> to vector<16x32xf32>
    %35 = arith.addf %32, %34 : vector<16x32xf32>
    %c0_19 = arith.constant 0 : index
    %c0_20 = arith.constant 0 : index
    %36 = vector.load %arg7[%c0_19, %c0_20] : memref<32x32xbf16, #tpu.memory_space<vmem>>, vector<32x32xbf16>
    %cst_21 = arith.constant dense<0.000000e+00> : vector<16x32xf32>
    %37 = tpu.matmul %25, %36, %cst_21 {dimension_numbers = #tpu.dot_dimension_numbers<[1], [0], [0], [1], [0, 0, 1, 1], [], []>} : vector<16x32xbf16>, vector<32x32xbf16>, vector<16x32xf32> -> vector<16x32xf32>
    %c0_22 = arith.constant 0 : index
    %c0_23 = arith.constant 0 : index
    %38 = vector.load %arg10[%c0_22, %c0_23] : memref<1x32xf32, #tpu.memory_space<vmem>>, vector<1x32xf32>
    %39 = vector.broadcast %38 : vector<1x32xf32> to vector<16x32xf32>
    %40 = arith.addf %37, %39 : vector<16x32xf32>
    %cst_24 = arith.constant 0.353553385 : f32
    %41 = vector.broadcast %cst_24 : f32 to vector<16x32xf32>
    %42 = arith.mulf %30, %41 : vector<16x32xf32>
    %43 = arith.truncf %42 : vector<16x32xf32> to vector<16x32xbf16>
    %44 = arith.truncf %35 : vector<16x32xf32> to vector<16x32xbf16>
    %45 = arith.truncf %40 : vector<16x32xf32> to vector<16x32xbf16>
    %46 = vector.extract_strided_slice %43 {offsets = [0, 0], sizes = [8, 8], strides = [1, 1]} : vector<16x32xbf16> to vector<8x8xbf16>
    %47 = vector.extract_strided_slice %43 {offsets = [0, 8], sizes = [8, 8], strides = [1, 1]} : vector<16x32xbf16> to vector<8x8xbf16>
    %48 = vector.extract_strided_slice %43 {offsets = [0, 16], sizes = [8, 8], strides = [1, 1]} : vector<16x32xbf16> to vector<8x8xbf16>
    %49 = vector.extract_strided_slice %43 {offsets = [0, 24], sizes = [8, 8], strides = [1, 1]} : vector<16x32xbf16> to vector<8x8xbf16>
    %50 = vector.extract_strided_slice %43 {offsets = [8, 0], sizes = [8, 8], strides = [1, 1]} : vector<16x32xbf16> to vector<8x8xbf16>
    %51 = vector.extract_strided_slice %43 {offsets = [8, 8], sizes = [8, 8], strides = [1, 1]} : vector<16x32xbf16> to vector<8x8xbf16>
    %52 = vector.extract_strided_slice %43 {offsets = [8, 16], sizes = [8, 8], strides = [1, 1]} : vector<16x32xbf16> to vector<8x8xbf16>
    %53 = vector.extract_strided_slice %43 {offsets = [8, 24], sizes = [8, 8], strides = [1, 1]} : vector<16x32xbf16> to vector<8x8xbf16>
    %54 = vector.shape_cast %46 : vector<8x8xbf16> to vector<1x8x8xbf16>
    %55 = vector.shape_cast %47 : vector<8x8xbf16> to vector<1x8x8xbf16>
    %56 = vector.shape_cast %48 : vector<8x8xbf16> to vector<1x8x8xbf16>
    %57 = vector.shape_cast %49 : vector<8x8xbf16> to vector<1x8x8xbf16>
    %58 = vector.shape_cast %50 : vector<8x8xbf16> to vector<1x8x8xbf16>
    %59 = vector.shape_cast %51 : vector<8x8xbf16> to vector<1x8x8xbf16>
    %60 = vector.shape_cast %52 : vector<8x8xbf16> to vector<1x8x8xbf16>
    %61 = vector.shape_cast %53 : vector<8x8xbf16> to vector<1x8x8xbf16>
    %62 = tpu.concatenate %54, %55, %56, %57, %58, %59, %60, %61 in 0 : vector<1x8x8xbf16>, vector<1x8x8xbf16>, vector<1x8x8xbf16>, vector<1x8x8xbf16>, vector<1x8x8xbf16>, vector<1x8x8xbf16>, vector<1x8x8xbf16>, vector<1x8x8xbf16> -> vector<8x8x8xbf16>
    %63 = vector.extract_strided_slice %44 {offsets = [0, 0], sizes = [8, 8], strides = [1, 1]} : vector<16x32xbf16> to vector<8x8xbf16>
    %64 = vector.extract_strided_slice %44 {offsets = [0, 8], sizes = [8, 8], strides = [1, 1]} : vector<16x32xbf16> to vector<8x8xbf16>
    %65 = vector.extract_strided_slice %44 {offsets = [0, 16], sizes = [8, 8], strides = [1, 1]} : vector<16x32xbf16> to vector<8x8xbf16>
    %66 = vector.extract_strided_slice %44 {offsets = [0, 24], sizes = [8, 8], strides = [1, 1]} : vector<16x32xbf16> to vector<8x8xbf16>
    %67 = vector.extract_strided_slice %44 {offsets = [8, 0], sizes = [8, 8], strides = [1, 1]} : vector<16x32xbf16> to vector<8x8xbf16>
    %68 = vector.extract_strided_slice %44 {offsets = [8, 8], sizes = [8, 8], strides = [1, 1]} : vector<16x32xbf16> to vector<8x8xbf16>
    %69 = vector.extract_strided_slice %44 {offsets = [8, 16], sizes = [8, 8], strides = [1, 1]} : vector<16x32xbf16> to vector<8x8xbf16>
    %70 = vector.extract_strided_slice %44 {offsets = [8, 24], sizes = [8, 8], strides = [1, 1]} : vector<16x32xbf16> to vector<8x8xbf16>
    %71 = vector.shape_cast %63 : vector<8x8xbf16> to vector<1x8x8xbf16>
    %72 = vector.shape_cast %64 : vector<8x8xbf16> to vector<1x8x8xbf16>
    %73 = vector.shape_cast %65 : vector<8x8xbf16> to vector<1x8x8xbf16>
    %74 = vector.shape_cast %66 : vector<8x8xbf16> to vector<1x8x8xbf16>
    %75 = vector.shape_cast %67 : vector<8x8xbf16> to vector<1x8x8xbf16>
    %76 = vector.shape_cast %68 : vector<8x8xbf16> to vector<1x8x8xbf16>
    %77 = vector.shape_cast %69 : vector<8x8xbf16> to vector<1x8x8xbf16>
    %78 = vector.shape_cast %70 : vector<8x8xbf16> to vector<1x8x8xbf16>
    %79 = tpu.concatenate %71, %72, %73, %74, %75, %76, %77, %78 in 0 : vector<1x8x8xbf16>, vector<1x8x8xbf16>, vector<1x8x8xbf16>, vector<1x8x8xbf16>, vector<1x8x8xbf16>, vector<1x8x8xbf16>, vector<1x8x8xbf16>, vector<1x8x8xbf16> -> vector<8x8x8xbf16>
    %80 = vector.extract_strided_slice %45 {offsets = [0, 0], sizes = [8, 8], strides = [1, 1]} : vector<16x32xbf16> to vector<8x8xbf16>
    %81 = vector.extract_strided_slice %45 {offsets = [0, 8], sizes = [8, 8], strides = [1, 1]} : vector<16x32xbf16> to vector<8x8xbf16>
    %82 = vector.extract_strided_slice %45 {offsets = [0, 16], sizes = [8, 8], strides = [1, 1]} : vector<16x32xbf16> to vector<8x8xbf16>
    %83 = vector.extract_strided_slice %45 {offsets = [0, 24], sizes = [8, 8], strides = [1, 1]} : vector<16x32xbf16> to vector<8x8xbf16>
    %84 = vector.extract_strided_slice %45 {offsets = [8, 0], sizes = [8, 8], strides = [1, 1]} : vector<16x32xbf16> to vector<8x8xbf16>
    %85 = vector.extract_strided_slice %45 {offsets = [8, 8], sizes = [8, 8], strides = [1, 1]} : vector<16x32xbf16> to vector<8x8xbf16>
    %86 = vector.extract_strided_slice %45 {offsets = [8, 16], sizes = [8, 8], strides = [1, 1]} : vector<16x32xbf16> to vector<8x8xbf16>
    %87 = vector.extract_strided_slice %45 {offsets = [8, 24], sizes = [8, 8], strides = [1, 1]} : vector<16x32xbf16> to vector<8x8xbf16>
    %88 = vector.shape_cast %80 : vector<8x8xbf16> to vector<1x8x8xbf16>
    %89 = vector.shape_cast %81 : vector<8x8xbf16> to vector<1x8x8xbf16>
    %90 = vector.shape_cast %82 : vector<8x8xbf16> to vector<1x8x8xbf16>
    %91 = vector.shape_cast %83 : vector<8x8xbf16> to vector<1x8x8xbf16>
    %92 = vector.shape_cast %84 : vector<8x8xbf16> to vector<1x8x8xbf16>
    %93 = vector.shape_cast %85 : vector<8x8xbf16> to vector<1x8x8xbf16>
    %94 = vector.shape_cast %86 : vector<8x8xbf16> to vector<1x8x8xbf16>
    %95 = vector.shape_cast %87 : vector<8x8xbf16> to vector<1x8x8xbf16>
    %96 = tpu.concatenate %88, %89, %90, %91, %92, %93, %94, %95 in 0 : vector<1x8x8xbf16>, vector<1x8x8xbf16>, vector<1x8x8xbf16>, vector<1x8x8xbf16>, vector<1x8x8xbf16>, vector<1x8x8xbf16>, vector<1x8x8xbf16>, vector<1x8x8xbf16> -> vector<8x8x8xbf16>
    "tpu.trace_start"() <{level = 10 : i32, message = "bqd,bkd->bqk"}> : () -> ()
    %cst_25 = arith.constant dense<0.000000e+00> : vector<8x8x8xf32>
    %97 = tpu.matmul %62, %79, %cst_25 {dimension_numbers = #tpu.dot_dimension_numbers<[2], [2], [1], [1], [0, 0, 0, 1, 1, 1], [0], [0]>} : vector<8x8x8xbf16>, vector<8x8x8xbf16>, vector<8x8x8xf32> -> vector<8x8x8xf32>
    "tpu.trace_stop"() : () -> ()
    %c0_26 = arith.constant 0 : index
    %c0_27 = arith.constant 0 : index
    %c0_28 = arith.constant 0 : index
    %98 = vector.load %arg2[%c0_26, %c0_27, %c0_28] : memref<8x1x8xf32, #tpu.memory_space<vmem>>, vector<8x1x8xf32>
    %99 = vector.broadcast %98 : vector<8x1x8xf32> to vector<8x8x8xf32>
    %100 = arith.addf %97, %99 : vector<8x8x8xf32>
    %cst_29 = arith.constant dense<0xFF800000> : vector<8x8xf32>
    %101 = vector.multi_reduction <maximumf>, %100, %cst_29 [2] : vector<8x8x8xf32> to vector<8x8xf32>
    %102 = vector.shape_cast %101 : vector<8x8xf32> to vector<8x8x1xf32>
    %103 = vector.broadcast %102 : vector<8x8x1xf32> to vector<8x8x8xf32>
    %104 = arith.subf %100, %103 : vector<8x8x8xf32>
    %105 = math.exp %104 : vector<8x8x8xf32>
    %cst_30 = arith.constant dense<0.000000e+00> : vector<8x8xf32>
    %106 = vector.multi_reduction <add>, %105, %cst_30 [2] : vector<8x8x8xf32> to vector<8x8xf32>
    %107 = vector.shape_cast %106 : vector<8x8xf32> to vector<8x8x1xf32>
    %108 = tpu.reciprocal %107 {approx = true} : vector<8x8x1xf32> -> vector<8x8x1xf32>
    %109 = vector.broadcast %108 : vector<8x8x1xf32> to vector<8x8x8xf32>
    %110 = arith.mulf %105, %109 : vector<8x8x8xf32>
    %111 = arith.truncf %110 : vector<8x8x8xf32> to vector<8x8x8xbf16>
    "tpu.trace_start"() <{level = 10 : i32, message = "bqk,bkd->bqd"}> : () -> ()
    %cst_31 = arith.constant dense<0.000000e+00> : vector<8x8x8xf32>
    %112 = tpu.matmul %111, %96, %cst_31 {dimension_numbers = #tpu.dot_dimension_numbers<[2], [1], [1], [2], [0, 0, 0, 1, 1, 2], [0], [0]>} : vector<8x8x8xbf16>, vector<8x8x8xbf16>, vector<8x8x8xf32> -> vector<8x8x8xf32>
    "tpu.trace_stop"() : () -> ()
    %113 = vector.extract_strided_slice %112 {offsets = [0, 0, 0], sizes = [1, 8, 8], strides = [1, 1, 1]} : vector<8x8x8xf32> to vector<1x8x8xf32>
    %114 = vector.shape_cast %113 : vector<1x8x8xf32> to vector<8x8xf32>
    %115 = vector.extract_strided_slice %112 {offsets = [1, 0, 0], sizes = [1, 8, 8], strides = [1, 1, 1]} : vector<8x8x8xf32> to vector<1x8x8xf32>
    %116 = vector.shape_cast %115 : vector<1x8x8xf32> to vector<8x8xf32>
    %117 = vector.extract_strided_slice %112 {offsets = [2, 0, 0], sizes = [1, 8, 8], strides = [1, 1, 1]} : vector<8x8x8xf32> to vector<1x8x8xf32>
    %118 = vector.shape_cast %117 : vector<1x8x8xf32> to vector<8x8xf32>
    %119 = vector.extract_strided_slice %112 {offsets = [3, 0, 0], sizes = [1, 8, 8], strides = [1, 1, 1]} : vector<8x8x8xf32> to vector<1x8x8xf32>
    %120 = vector.shape_cast %119 : vector<1x8x8xf32> to vector<8x8xf32>
    %121 = tpu.concatenate %114, %116, %118, %120 in 1 : vector<8x8xf32>, vector<8x8xf32>, vector<8x8xf32>, vector<8x8xf32> -> vector<8x32xf32>
    %122 = vector.extract_strided_slice %112 {offsets = [4, 0, 0], sizes = [1, 8, 8], strides = [1, 1, 1]} : vector<8x8x8xf32> to vector<1x8x8xf32>
    %123 = vector.shape_cast %122 : vector<1x8x8xf32> to vector<8x8xf32>
    %124 = vector.extract_strided_slice %112 {offsets = [5, 0, 0], sizes = [1, 8, 8], strides = [1, 1, 1]} : vector<8x8x8xf32> to vector<1x8x8xf32>
    %125 = vector.shape_cast %124 : vector<1x8x8xf32> to vector<8x8xf32>
    %126 = vector.extract_strided_slice %112 {offsets = [6, 0, 0], sizes = [1, 8, 8], strides = [1, 1, 1]} : vector<8x8x8xf32> to vector<1x8x8xf32>
    %127 = vector.shape_cast %126 : vector<1x8x8xf32> to vector<8x8xf32>
    %128 = vector.extract_strided_slice %112 {offsets = [7, 0, 0], sizes = [1, 8, 8], strides = [1, 1, 1]} : vector<8x8x8xf32> to vector<1x8x8xf32>
    %129 = vector.shape_cast %128 : vector<1x8x8xf32> to vector<8x8xf32>
    %130 = tpu.concatenate %123, %125, %127, %129 in 1 : vector<8x8xf32>, vector<8x8xf32>, vector<8x8xf32>, vector<8x8xf32> -> vector<8x32xf32>
    %131 = tpu.concatenate %121, %130 in 0 : vector<8x32xf32>, vector<8x32xf32> -> vector<16x32xf32>
    %132 = arith.truncf %131 : vector<16x32xf32> to vector<16x32xbf16>
    %c0_32 = arith.constant 0 : index
    %c0_33 = arith.constant 0 : index
    %133 = vector.load %arg11[%c0_32, %c0_33] : memref<32x32xbf16, #tpu.memory_space<vmem>>, vector<32x32xbf16>
    %cst_34 = arith.constant dense<0.000000e+00> : vector<16x32xf32>
    %134 = tpu.matmul %132, %133, %cst_34 {dimension_numbers = #tpu.dot_dimension_numbers<[1], [0], [0], [1], [0, 0, 1, 1], [], []>} : vector<16x32xbf16>, vector<32x32xbf16>, vector<16x32xf32> -> vector<16x32xf32>
    %c0_35 = arith.constant 0 : index
    %c0_36 = arith.constant 0 : index
    %135 = vector.load %arg12[%c0_35, %c0_36] : memref<1x32xf32, #tpu.memory_space<vmem>>, vector<1x32xf32>
    %136 = vector.broadcast %135 : vector<1x32xf32> to vector<16x32xf32>
    %137 = arith.addf %134, %136 : vector<16x32xf32>
    %138 = arith.addf %0, %137 : vector<16x32xf32>
    %c0_37 = arith.constant 0 : index
    %c0_38 = arith.constant 0 : index
    %139 = vector.load %arg13[%c0_37, %c0_38] : memref<1x32xf32, #tpu.memory_space<vmem>>, vector<1x32xf32>
    %c0_39 = arith.constant 0 : index
    %c0_40 = arith.constant 0 : index
    %140 = vector.load %arg14[%c0_39, %c0_40] : memref<1x32xf32, #tpu.memory_space<vmem>>, vector<1x32xf32>
    %cst_41 = arith.constant dense<0.000000e+00> : vector<16xf32>
    %141 = vector.multi_reduction <add>, %138, %cst_41 [1] : vector<16x32xf32> to vector<16xf32>
    %142 = vector.shape_cast %141 : vector<16xf32> to vector<16x1xf32>
    %cst_42 = arith.constant 3.200000e+01 : f32
    %143 = vector.broadcast %cst_42 : f32 to vector<16x1xf32>
    %144 = arith.divf %142, %143 : vector<16x1xf32>
    %145 = vector.broadcast %144 : vector<16x1xf32> to vector<16x32xf32>
    %146 = arith.subf %138, %145 : vector<16x32xf32>
    %147 = arith.mulf %146, %146 : vector<16x32xf32>
    %cst_43 = arith.constant dense<0.000000e+00> : vector<16xf32>
    %148 = vector.multi_reduction <add>, %147, %cst_43 [1] : vector<16x32xf32> to vector<16xf32>
    %149 = vector.shape_cast %148 : vector<16xf32> to vector<16x1xf32>
    %cst_44 = arith.constant 3.200000e+01 : f32
    %150 = vector.broadcast %cst_44 : f32 to vector<16x1xf32>
    %151 = arith.divf %149, %150 : vector<16x1xf32>
    %152 = vector.broadcast %144 : vector<16x1xf32> to vector<16x32xf32>
    %153 = arith.subf %138, %152 : vector<16x32xf32>
    %cst_45 = arith.constant 9.99999974E-6 : f32
    %154 = vector.broadcast %cst_45 : f32 to vector<16x1xf32>
    %155 = arith.addf %151, %154 : vector<16x1xf32>
    %156 = math.rsqrt %155 : vector<16x1xf32>
    %157 = vector.broadcast %156 : vector<16x1xf32> to vector<16x32xf32>
    %158 = arith.mulf %153, %157 : vector<16x32xf32>
    %159 = vector.broadcast %139 : vector<1x32xf32> to vector<16x32xf32>
    %160 = arith.mulf %158, %159 : vector<16x32xf32>
    %161 = vector.broadcast %140 : vector<1x32xf32> to vector<16x32xf32>
    %162 = arith.addf %160, %161 : vector<16x32xf32>
    %163 = arith.truncf %162 : vector<16x32xf32> to vector<16x32xbf16>
    %c0_46 = arith.constant 0 : index
    %c0_47 = arith.constant 0 : index
    %164 = vector.load %arg15[%c0_46, %c0_47] : memref<32x128xbf16, #tpu.memory_space<vmem>>, vector<32x128xbf16>
    %cst_48 = arith.constant dense<0.000000e+00> : vector<16x128xf32>
    %165 = tpu.matmul %163, %164, %cst_48 {dimension_numbers = #tpu.dot_dimension_numbers<[1], [0], [0], [1], [0, 0, 1, 1], [], []>} : vector<16x32xbf16>, vector<32x128xbf16>, vector<16x128xf32> -> vector<16x128xf32>
    %c0_49 = arith.constant 0 : index
    %c0_50 = arith.constant 0 : index
    %166 = vector.load %arg16[%c0_49, %c0_50] : memref<1x128xf32, #tpu.memory_space<vmem>>, vector<1x128xf32>
    %167 = vector.broadcast %166 : vector<1x128xf32> to vector<16x128xf32>
    %168 = arith.addf %165, %167 : vector<16x128xf32>
    %cst_51 = arith.constant 1.702000e+00 : f32
    %169 = vector.broadcast %cst_51 : f32 to vector<16x128xf32>
    %170 = arith.mulf %169, %168 : vector<16x128xf32>
    %171 = arith.negf %170 : vector<16x128xf32>
    %172 = math.exp %171 : vector<16x128xf32>
    %cst_52 = arith.constant 1.000000e+00 : f32
    %173 = vector.broadcast %cst_52 : f32 to vector<16x128xf32>
    %174 = arith.addf %173, %172 : vector<16x128xf32>
    %175 = arith.divf %173, %174 : vector<16x128xf32>
    %176 = arith.mulf %168, %175 : vector<16x128xf32>
    %177 = arith.truncf %176 : vector<16x128xf32> to vector<16x128xbf16>
    %c0_53 = arith.constant 0 : index
    %c0_54 = arith.constant 0 : index
    %178 = vector.load %arg17[%c0_53, %c0_54] : memref<128x32xbf16, #tpu.memory_space<vmem>>, vector<128x32xbf16>
    %cst_55 = arith.constant dense<0.000000e+00> : vector<16x32xf32>
    %179 = tpu.matmul %177, %178, %cst_55 {dimension_numbers = #tpu.dot_dimension_numbers<[1], [0], [0], [1], [0, 0, 1, 1], [], []>} : vector<16x128xbf16>, vector<128x32xbf16>, vector<16x32xf32> -> vector<16x32xf32>
    %c0_56 = arith.constant 0 : index
    %c0_57 = arith.constant 0 : index
    %180 = vector.load %arg18[%c0_56, %c0_57] : memref<1x32xf32, #tpu.memory_space<vmem>>, vector<1x32xf32>
    %181 = vector.broadcast %180 : vector<1x32xf32> to vector<16x32xf32>
    %182 = arith.addf %179, %181 : vector<16x32xf32>
    %183 = arith.addf %138, %182 : vector<16x32xf32>
    %c0_58 = arith.constant 0 : index
    %c0_59 = arith.constant 0 : index
    %184 = vector.load %arg19[%c0_58, %c0_59] : memref<16x32xf32, #tpu.memory_space<vmem>>, vector<16x32xf32>
    tpu.vector_store %arg19[%c0_58, %c0_59], %183 {strides = array<i32>} : memref<16x32xf32, #tpu.memory_space<vmem>>, vector<16x32xf32>,
    return
  }
  func.func @transform_0(%arg0: i32) -> (i32, i32) {
    %c0_i32 = arith.constant 0 : i32
    %c0_i32_0 = arith.constant 0 : i32
    return %arg0, %c0_i32 : i32, i32
  }
  func.func @transform_1(%arg0: i32) -> (i32, i32, i32) {
    %c0_i32 = arith.constant 0 : i32
    %c0_i32_0 = arith.constant 0 : i32
    %c0_i32_1 = arith.constant 0 : i32
    return %arg0, %c0_i32, %c0_i32_0 : i32, i32, i32
  }
  func.func @transform_2(%arg0: i32) -> (i32, i32) {
    %c0_i32 = arith.constant 0 : i32
    %c0_i32_0 = arith.constant 0 : i32
    %c0_i32_1 = arith.constant 0 : i32
    return %c0_i32, %c0_i32_0 : i32, i32
  }
  func.func @transform_3(%arg0: i32) -> (i32, i32) {
    %c0_i32 = arith.constant 0 : i32
    %c0_i32_0 = arith.constant 0 : i32
    %c0_i32_1 = arith.constant 0 : i32
    return %c0_i32, %c0_i32_0 : i32, i32
  }
  func.func @transform_4(%arg0: i32) -> (i32, i32) {
    %c0_i32 = arith.constant 0 : i32
    %c0_i32_0 = arith.constant 0 : i32
    %c0_i32_1 = arith.constant 0 : i32
    return %c0_i32, %c0_i32_0 : i32, i32
  }
  func.func @transform_5(%arg0: i32) -> (i32, i32) {
    %c0_i32 = arith.constant 0 : i32
    %c0_i32_0 = arith.constant 0 : i32
    %c0_i32_1 = arith.constant 0 : i32
    return %c0_i32, %c0_i32_0 : i32, i32
  }
  func.func @transform_6(%arg0: i32) -> (i32, i32) {
    %c0_i32 = arith.constant 0 : i32
    %c0_i32_0 = arith.constant 0 : i32
    %c0_i32_1 = arith.constant 0 : i32
    return %c0_i32, %c0_i32_0 : i32, i32
  }
  func.func @transform_7(%arg0: i32) -> (i32, i32) {
    %c0_i32 = arith.constant 0 : i32
    %c0_i32_0 = arith.constant 0 : i32
    %c0_i32_1 = arith.constant 0 : i32
    return %c0_i32, %c0_i32_0 : i32, i32
  }
  func.func @transform_8(%arg0: i32) -> (i32, i32) {
    %c0_i32 = arith.constant 0 : i32
    %c0_i32_0 = arith.constant 0 : i32
    %c0_i32_1 = arith.constant 0 : i32
    return %c0_i32, %c0_i32_0 : i32, i32
  }
  func.func @transform_9(%arg0: i32) -> (i32, i32) {
    %c0_i32 = arith.constant 0 : i32
    %c0_i32_0 = arith.constant 0 : i32
    %c0_i32_1 = arith.constant 0 : i32
    return %c0_i32, %c0_i32_0 : i32, i32
  }
  func.func @transform_10(%arg0: i32) -> (i32, i32) {
    %c0_i32 = arith.constant 0 : i32
    %c0_i32_0 = arith.constant 0 : i32
    %c0_i32_1 = arith.constant 0 : i32
    return %c0_i32, %c0_i32_0 : i32, i32
  }
  func.func @transform_11(%arg0: i32) -> (i32, i32) {
    %c0_i32 = arith.constant 0 : i32
    %c0_i32_0 = arith.constant 0 : i32
    %c0_i32_1 = arith.constant 0 : i32
    return %c0_i32, %c0_i32_0 : i32, i32
  }
  func.func @transform_12(%arg0: i32) -> (i32, i32) {
    %c0_i32 = arith.constant 0 : i32
    %c0_i32_0 = arith.constant 0 : i32
    %c0_i32_1 = arith.constant 0 : i32
    return %c0_i32, %c0_i32_0 : i32, i32
  }
  func.func @transform_13(%arg0: i32) -> (i32, i32) {
    %c0_i32 = arith.constant 0 : i32
    %c0_i32_0 = arith.constant 0 : i32
    %c0_i32_1 = arith.constant 0 : i32
    return %c0_i32, %c0_i32_0 : i32, i32
  }
  func.func @transform_14(%arg0: i32) -> (i32, i32) {
    %c0_i32 = arith.constant 0 : i32
    %c0_i32_0 = arith.constant 0 : i32
    %c0_i32_1 = arith.constant 0 : i32
    return %c0_i32, %c0_i32_0 : i32, i32
  }
  func.func @transform_15(%arg0: i32) -> (i32, i32) {
    %c0_i32 = arith.constant 0 : i32
    %c0_i32_0 = arith.constant 0 : i32
    %c0_i32_1 = arith.constant 0 : i32
    return %c0_i32, %c0_i32_0 : i32, i32
  }
  func.func @transform_16(%arg0: i32) -> (i32, i32) {
    %c0_i32 = arith.constant 0 : i32
    %c0_i32_0 = arith.constant 0 : i32
    %c0_i32_1 = arith.constant 0 : i32
    return %c0_i32, %c0_i32_0 : i32, i32
  }
  func.func @transform_17(%arg0: i32) -> (i32, i32) {
    %c0_i32 = arith.constant 0 : i32
    %c0_i32_0 = arith.constant 0 : i32
    %c0_i32_1 = arith.constant 0 : i32
    return %c0_i32, %c0_i32_0 : i32, i32
  }
  func.func @transform_18(%arg0: i32) -> (i32, i32) {
    %c0_i32 = arith.constant 0 : i32
    %c0_i32_0 = arith.constant 0 : i32
    return %arg0, %c0_i32 : i32, i32
  }
}

</mosaic_0001>

<llo_original>
// kernel: tpu_custom_call.1
$region0: #{tpu_custom_call.1}
  #allocation0 [shape = 'u32[]', space=smem, size = 0x4, offset = 0x4, fixed_abs, tag = 'smem constant byte address 0x4 - core index']
  #allocation1 [shape = 'u32[144,128]{1,0:T(1,128)}', space=vmem, size = 0x12000, scoped, tag = 'internal scratch']
  %s0 = inlined_call_operand.vmem [shape: f32[16,32], index: 0, kind: input, shape index: {}]
  %s1 = inlined_call_operand.hbm [shape: f32[8,1,8], index: 1, kind: input, shape index: {}]
  %s2 = inlined_call_operand.vmem [shape: f32[1,32], index: 2, kind: input, shape index: {}]
  %s3 = inlined_call_operand.vmem [shape: f32[1,32], index: 3, kind: input, shape index: {}]
  %s4 = inlined_call_operand.vmem [shape: bf16[32,32], index: 4, kind: input, shape index: {}]
  %s5 = inlined_call_operand.vmem [shape: bf16[32,32], index: 5, kind: input, shape index: {}]
  %s6 = inlined_call_operand.vmem [shape: bf16[32,32], index: 6, kind: input, shape index: {}]
  %s7 = inlined_call_operand.hbm [shape: f32[1,32], index: 7, kind: input, shape index: {}]
  %s8 = inlined_call_operand.hbm [shape: f32[1,32], index: 8, kind: input, shape index: {}]
  %s9 = inlined_call_operand.hbm [shape: f32[1,32], index: 9, kind: input, shape index: {}]
  %s10 = inlined_call_operand.vmem [shape: bf16[32,32], index: 10, kind: input, shape index: {}]
  %s11 = inlined_call_operand.vmem [shape: f32[1,32], index: 11, kind: input, shape index: {}]
  %s12 = inlined_call_operand.vmem [shape: f32[1,32], index: 12, kind: input, shape index: {}]
  %s13 = inlined_call_operand.vmem [shape: f32[1,32], index: 13, kind: input, shape index: {}]
  %s14 = inlined_call_operand.vmem [shape: bf16[32,128], index: 14, kind: input, shape index: {}]
  %s15 = inlined_call_operand.vmem [shape: f32[1,128], index: 15, kind: input, shape index: {}]
  %s16 = inlined_call_operand.vmem [shape: bf16[128,32], index: 16, kind: input, shape index: {}]
  %s17 = inlined_call_operand.vmem [shape: f32[1,32], index: 17, kind: input, shape index: {}]
  %s18 = inlined_call_operand.hbm [shape: f32[16,32], index: 18, kind: output, shape index: {}]
  %s19 = sld [smem:[#allocation0]]
  $region98: #{tpu_custom_call.1} parent=0
    _
  %s21 = ssub.s32 1, %s19
  %s22 = scalar_select 0, %s21, %s19
  $region1: #{tpu_custom_call.1} parent=0
    #allocation2 [shape = 'u8[4096]{0}', space=vmem, size = 0x1000, scoped, tag = 'input window, operand 1, single buffered']
    #allocation3 [shape = 's32[1]{0}', space=sflag, size = 0x4, scoped, tag = 'scoped memory for tpu_custom_call.1']
    #allocation4 [shape = 's32[1]{0}', space=sflag, size = 0x4, scoped, tag = 'scoped memory for tpu_custom_call.1']
    #allocation5 [shape = 'u8[512]{0}', space=vmem, size = 0x400, scoped, tag = 'input window, operand 7, single buffered']
    #allocation6 [shape = 's32[1]{0}', space=sflag, size = 0x4, scoped, tag = 'scoped memory for tpu_custom_call.1']
    #allocation7 [shape = 'u8[512]{0}', space=vmem, size = 0x400, scoped, tag = 'input window, operand 8, single buffered']
    #allocation8 [shape = 'u8[512]{0}', space=vmem, size = 0x400, scoped, tag = 'input window, operand 9, single buffered']
    #allocation9 [shape = 's32[1]{0}', space=sflag, size = 0x4, scoped, tag = 'scoped memory for tpu_custom_call.1']
    #allocation10 [shape = 'u8[8192]{0}', space=vmem, size = 0x2000, scoped, tag = 'output window, operand 0, single buffered']
    %23 = vsyncpa [#allocation3], 0
    %24 = vsyncpa [#allocation6], 0
    %25 = vsyncpa [#allocation9], 0
    %26 = vsyncpa [#allocation4], 0
    // Predicated region
    $region2: #{tpu_custom_call.1} parent=1 // pred_check
      _
    $region3: #{tpu_custom_call.1} parent=1 // pred_check_branch
      %28 = sbr.rel (0) target = $region5
    $region4: #{tpu_custom_call.1} parent=1 // pred_region
      _
    $region5: #{tpu_custom_call.1} parent=1 // pred_fallthru
      _
    // Predicated region
    $region6: #{tpu_custom_call.1} parent=1 // pred_check
      _
    $region7: #{tpu_custom_call.1} parent=1 // pred_check_branch
      %30 = sbr.rel (0) target = $region9
    $region8: #{tpu_custom_call.1} parent=1 // pred_region
      %s32 = ssub.s32 128, 128
      %33 = vsyncadd [#allocation3], %s32
      %s34 = sshll.u32 [#allocation2], 4
      %s35 = int_to_ptr.vmem [resolvable:$true] %s34
      %40 = dma.hbm_to_vmem [thread:$0]  %s1, 128, %s35, [#allocation3], 16, 16, 1
    $region9: #{tpu_custom_call.1} parent=1 // pred_fallthru
      _
    // Predicated region
    $region10: #{tpu_custom_call.1} parent=1 // pred_check
      _
    $region11: #{tpu_custom_call.1} parent=1 // pred_check_branch
      %42 = sbr.rel (0) target = $region13
    $region12: #{tpu_custom_call.1} parent=1 // pred_region
      _
    $region13: #{tpu_custom_call.1} parent=1 // pred_fallthru
      _
    // Predicated region
    $region14: #{tpu_custom_call.1} parent=1 // pred_check
      _
    $region15: #{tpu_custom_call.1} parent=1 // pred_check_branch
      %44 = sbr.rel (0) target = $region17
    $region16: #{tpu_custom_call.1} parent=1 // pred_region
      _
    $region17: #{tpu_custom_call.1} parent=1 // pred_fallthru
      _
    // Predicated region
    $region18: #{tpu_custom_call.1} parent=1 // pred_check
      _
    $region19: #{tpu_custom_call.1} parent=1 // pred_check_branch
      %46 = sbr.rel (0) target = $region21
    $region20: #{tpu_custom_call.1} parent=1 // pred_region
      _
    $region21: #{tpu_custom_call.1} parent=1 // pred_fallthru
      _
    // Predicated region
    $region22: #{tpu_custom_call.1} parent=1 // pred_check
      _
    $region23: #{tpu_custom_call.1} parent=1 // pred_check_branch
      %48 = sbr.rel (0) target = $region25
    $region24: #{tpu_custom_call.1} parent=1 // pred_region
      _
    $region25: #{tpu_custom_call.1} parent=1 // pred_fallthru
      _
    // Predicated region
    $region26: #{tpu_custom_call.1} parent=1 // pred_check
      _
    $region27: #{tpu_custom_call.1} parent=1 // pred_check_branch
      %50 = sbr.rel (0) target = $region29
    $region28: #{tpu_custom_call.1} parent=1 // pred_region
      _
    $region29: #{tpu_custom_call.1} parent=1 // pred_fallthru
      _
    // Predicated region
    $region30: #{tpu_custom_call.1} parent=1 // pred_check
      _
    $region31: #{tpu_custom_call.1} parent=1 // pred_check_branch
      %52 = sbr.rel (0) target = $region33
    $region32: #{tpu_custom_call.1} parent=1 // pred_region
      %s54 = ssub.s32 16, 16
      %55 = vsyncadd [#allocation6], %s54
      %s57 = sshll.u32 [#allocation5], 4
      %s58 = int_to_ptr.vmem [resolvable:$true] %s57
      %60 = dma.hbm_to_vmem [thread:$0]  %s7, 16, %s58, [#allocation6]
    $region33: #{tpu_custom_call.1} parent=1 // pred_fallthru
      _
    // Predicated region
    $region34: #{tpu_custom_call.1} parent=1 // pred_check
      _
    $region35: #{tpu_custom_call.1} parent=1 // pred_check_branch
      %62 = sbr.rel (0) target = $region37
    $region36: #{tpu_custom_call.1} parent=1 // pred_region
      %s64 = ssub.s32 16, 16
      %65 = vsyncadd [#allocation6], %s64
      %s67 = sshll.u32 [#allocation7], 4
      %s68 = int_to_ptr.vmem [resolvable:$true] %s67
      %70 = dma.hbm_to_vmem [thread:$0]  %s8, 16, %s68, [#allocation6]
    $region37: #{tpu_custom_call.1} parent=1 // pred_fallthru
      _
    // Predicated region
    $region38: #{tpu_custom_call.1} parent=1 // pred_check
      _
    $region39: #{tpu_custom_call.1} parent=1 // pred_check_branch
      %72 = sbr.rel (0) target = $region41
    $region40: #{tpu_custom_call.1} parent=1 // pred_region
      %s74 = ssub.s32 16, 16
      %75 = vsyncadd [#allocation9], %s74
      %s77 = sshll.u32 [#allocation8], 4
      %s78 = int_to_ptr.vmem [resolvable:$true] %s77
      %80 = dma.hbm_to_vmem [thread:$0]  %s9, 16, %s78, [#allocation9]
    $region41: #{tpu_custom_call.1} parent=1 // pred_fallthru
      _
    // Predicated region
    $region42: #{tpu_custom_call.1} parent=1 // pred_check
      _
    $region43: #{tpu_custom_call.1} parent=1 // pred_check_branch
      %82 = sbr.rel (0) target = $region45
    $region44: #{tpu_custom_call.1} parent=1 // pred_region
      _
    $region45: #{tpu_custom_call.1} parent=1 // pred_fallthru
      _
    // Predicated region
    $region46: #{tpu_custom_call.1} parent=1 // pred_check
      _
    $region47: #{tpu_custom_call.1} parent=1 // pred_check_branch
      %84 = sbr.rel (0) target = $region49
    $region48: #{tpu_custom_call.1} parent=1 // pred_region
      _
    $region49: #{tpu_custom_call.1} parent=1 // pred_fallthru
      _
    // Predicated region
    $region50: #{tpu_custom_call.1} parent=1 // pred_check
      _
    $region51: #{tpu_custom_call.1} parent=1 // pred_check_branch
      %86 = sbr.rel (0) target = $region53
    $region52: #{tpu_custom_call.1} parent=1 // pred_region
      _
    $region53: #{tpu_custom_call.1} parent=1 // pred_fallthru
      _
    // Predicated region
    $region54: #{tpu_custom_call.1} parent=1 // pred_check
      _
    $region55: #{tpu_custom_call.1} parent=1 // pred_check_branch
      %88 = sbr.rel (0) target = $region57
    $region56: #{tpu_custom_call.1} parent=1 // pred_region
      _
    $region57: #{tpu_custom_call.1} parent=1 // pred_fallthru
      _
    // Predicated region
    $region58: #{tpu_custom_call.1} parent=1 // pred_check
      _
    $region59: #{tpu_custom_call.1} parent=1 // pred_check_branch
      %90 = sbr.rel (0) target = $region61
    $region60: #{tpu_custom_call.1} parent=1 // pred_region
      _
    $region61: #{tpu_custom_call.1} parent=1 // pred_fallthru
      _
    // Predicated region
    $region62: #{tpu_custom_call.1} parent=1 // pred_check
      _
    $region63: #{tpu_custom_call.1} parent=1 // pred_check_branch
      %92 = sbr.rel (0) target = $region65
    $region64: #{tpu_custom_call.1} parent=1 // pred_region
      _
    $region65: #{tpu_custom_call.1} parent=1 // pred_fallthru
      _
    // Predicated region
    $region66: #{tpu_custom_call.1} parent=1 // pred_check
      _
    $region67: #{tpu_custom_call.1} parent=1 // pred_check_branch
      %94 = sbr.rel (0) target = $region69
    $region68: #{tpu_custom_call.1} parent=1 // pred_region
      _
    $region69: #{tpu_custom_call.1} parent=1 // pred_fallthru
      _
    // Predicated region
    $region70: #{tpu_custom_call.1} parent=1 // pred_check
      _
    $region71: #{tpu_custom_call.1} parent=1 // pred_check_branch
      %96 = sbr.rel (0) target = $region73
    $region72: #{tpu_custom_call.1} parent=1 // pred_region
      _
    $region73: #{tpu_custom_call.1} parent=1 // pred_fallthru
      _
    // Predicated region
    $region74: #{tpu_custom_call.1} parent=1 // pred_check
      _
    $region75: #{tpu_custom_call.1} parent=1 // pred_check_branch
      %98 = sbr.rel (0) target = $region77
    $region76: #{tpu_custom_call.1} parent=1 // pred_region
      %99 = dma.done [#allocation3], 128
    $region77: #{tpu_custom_call.1} parent=1 // pred_fallthru
      _
    // Predicated region
    $region78: #{tpu_custom_call.1} parent=1 // pred_check
      _
    $region79: #{tpu_custom_call.1} parent=1 // pred_check_branch
      %101 = sbr.rel (0) target = $region81
    $region80: #{tpu_custom_call.1} parent=1 // pred_region
      %102 = dma.done [#allocation6], 16
    $region81: #{tpu_custom_call.1} parent=1 // pred_fallthru
      _
    // Predicated region
    $region82: #{tpu_custom_call.1} parent=1 // pred_check
      _
    $region83: #{tpu_custom_call.1} parent=1 // pred_check_branch
      %104 = sbr.rel (0) target = $region85
    $region84: #{tpu_custom_call.1} parent=1 // pred_region
      %105 = dma.done [#allocation6], 16
    $region85: #{tpu_custom_call.1} parent=1 // pred_fallthru
      _
    // Predicated region
    $region86: #{tpu_custom_call.1} parent=1 // pred_check
      _
    $region87: #{tpu_custom_call.1} parent=1 // pred_check_branch
      %107 = sbr.rel (0) target = $region89
    $region88: #{tpu_custom_call.1} parent=1 // pred_region
      %108 = dma.done [#allocation9], 16
    $region89: #{tpu_custom_call.1} parent=1 // pred_fallthru
      _
    %v110 = vld [vmem:[%s0] sm:$0xff]
    %v111 = vld [vmem:[%s0 + $0x8] sm:$0xff]
    %v112 = vld [vmem:[%s2] sm:$0x1]
    %v113 = vld [vmem:[%s3] sm:$0x1]
    %vm114 = vcmask 261120
    %v115 = vsel %vm114, %v110, 0.0
    %116 = vadd.xlane.f32.xlu0 %v115
    %v117 = vpop.xlane.xlu0 %116
    %v118 = vsel %vm114, %v111, 0.0
    %119 = vadd.xlane.f32.xlu0 %v118
    %v120 = vpop.xlane.xlu0 %119
    %v121 = vrcp.pop 32.0
    %v122 = vmul.f32 %v117, %v121
    %v123 = vmul.f32 %v120, %v121
    %v124 = vsub.f32 %v110, %v122
    %v125 = vsub.f32 %v111, %v123
    %v126 = vmul.f32 %v124, %v124
    %v127 = vmul.f32 %v125, %v125
    %v128 = vsel %vm114, %v126, 0.0
    %129 = vadd.xlane.f32.xlu0 %v128
    %v130 = vpop.xlane.xlu0 %129
    %v131 = vsel %vm114, %v127, 0.0
    %132 = vadd.xlane.f32.xlu0 %v131
    %v133 = vpop.xlane.xlu0 %132
    %v134 = vmul.f32 %v130, %v121
    %v135 = vmul.f32 %v133, %v121
    %v136 = vadd.f32 %v134, 1e-05
    %v137 = vadd.f32 %v135, 1e-05
    %v138 = vrsqrt.pop %v136
    %v139 = vrsqrt.pop %v137
    %v140 = vmul.f32 %v124, %v138
    %v141 = vmul.f32 %v125, %v139
    %v143 = vlaneseq
    %v144 = vshrl.u32 %v143, 7
    %v145 = vsub.s32 0, %v144
    %v146 = vrot.slane %v112, %v145
    %v148 = vmul.f32 %v140, %v146
    %v149 = vmul.f32 %v141, %v146
    %v151 = vlaneseq
    %v152 = vshrl.u32 %v151, 7
    %v153 = vsub.s32 0, %v152
    %v154 = vrot.slane %v113, %v153
    %v156 = vadd.f32 %v148, %v154
    %v157 = vadd.f32 %v149, %v154
    %v158 = vpack.c.bf16 %v157, %v156
    %v159 = vld [vmem:[%s4] sm:$0xf]
    %v160 = vld [vmem:[%s4 + $0x4] sm:$0xf]
    %v161 = vld [vmem:[%s4 + $0x8] sm:$0xf]
    %v162 = vld [vmem:[%s4 + $0xc] sm:$0xf]
    %v163 = vld [vmem:[#allocation5] sm:$0x1]
    %v165 = vlaneseq
    %v166 = vshrl.u32 %v165, 7
    %v167 = vsub.s32 0, %v166
    %v168 = vrot.slane %v163, %v167
    %v174 = vunpack.c.l.b16 %v159
    %v175 = vunpack.c.l.b16 %v160
    %v176 = vunpack.c.l.b16 %v161
    %v177 = vunpack.c.l.b16 %v162
    %v178 = vpack.c.b16 %v175, %v174
    %v179 = vpack.c.b16 %v177, %v176
    %v183 = vsel %vm114, %v158, 0
    %185 = vmatprep.subr.bf16.mxu0 0
    %186 = vmatpush1.bf16.msra.mxu0 %v178
    %187 = vmatprep.subr.bf16.mxu0 0
    %188 = vmatpush1.bf16.msra.mxu0 %v179
    %189 = vmatprep.subr.bf16.mxu0 0
    %190 = vmatpush1.bf16.msra.mxu0 0
    %191 = vmatprep.subr.bf16.mxu0 0
    %192 = vmatpush1.bf16.msra.mxu0 0
    %193 = vmatprep.subr.bf16.mxu0 0
    %194 = vmatpush1.bf16.msra.mxu0 0
    %195 = vmatprep.subr.bf16.mxu0 0
    %196 = vmatpush1.bf16.msra.mxu0 0
    %197 = vmatprep.subr.bf16.mxu0 0
    %198 = vmatpush1.bf16.msra.mxu0 0
    %199 = vmatprep.subr.bf16.mxu0 0
    %200 = vmatpush1.bf16.msra.mxu0 0
    %201 = vmatprep.subr.bf16.mxu0 0
    %202 = vmatpush1.bf16.msra.mxu0 0
    %203 = vmatprep.subr.bf16.mxu0 0
    %204 = vmatpush1.bf16.msra.mxu0 0
    %205 = vmatprep.subr.bf16.mxu0 0
    %206 = vmatpush1.bf16.msra.mxu0 0
    %207 = vmatprep.subr.bf16.mxu0 0
    %208 = vmatpush1.bf16.msra.mxu0 0
    %209 = vmatprep.subr.bf16.mxu0 0
    %210 = vmatpush1.bf16.msra.mxu0 0
    %211 = vmatprep.subr.bf16.mxu0 0
    %212 = vmatpush1.bf16.msra.mxu0 0
    %213 = vmatprep.subr.bf16.mxu0 0
    %214 = vmatpush1.bf16.msra.mxu0 0
    %215 = vmatprep.subr.bf16.mxu0 0
    %216 = vmatpush1.bf16.msra.mxu0 0
    %217 = vmatprep.mubr.bf16.mxu0 0
    %218 = vmatmul.mubr.bf16.gmra.mrb[0].mxu0 %v183
    %v219 = vpop.f32.mrb[0].mxu0
    %v220 = vadd.f32 %v168, %v219
    %v221 = vpop.f32.mrb[0].mxu0
    %v222 = vpop.f32.mrb[0].mxu0
    %v223 = vadd.f32 %v168, %v222
    %v224 = vpop.f32.mrb[0].mxu0
    %225 = vdwg.mxu0
    %v226 = vld [vmem:[%s5] sm:$0xf]
    %v227 = vld [vmem:[%s5 + $0x4] sm:$0xf]
    %v228 = vld [vmem:[%s5 + $0x8] sm:$0xf]
    %v229 = vld [vmem:[%s5 + $0xc] sm:$0xf]
    %v230 = vld [vmem:[#allocation7] sm:$0x1]
    %v232 = vlaneseq
    %v233 = vshrl.u32 %v232, 7
    %v234 = vsub.s32 0, %v233
    %v235 = vrot.slane %v230, %v234
    %v241 = vunpack.c.l.b16 %v226
    %v242 = vunpack.c.l.b16 %v227
    %v243 = vunpack.c.l.b16 %v228
    %v244 = vunpack.c.l.b16 %v229
    %v245 = vpack.c.b16 %v242, %v241
    %v246 = vpack.c.b16 %v244, %v243
    %249 = vmatprep.subr.bf16.mxu0 0
    %250 = vmatpush1.bf16.msra.mxu0 %v245
    %251 = vmatprep.subr.bf16.mxu0 0
    %252 = vmatpush1.bf16.msra.mxu0 %v246
    %253 = vmatprep.subr.bf16.mxu0 0
    %254 = vmatpush1.bf16.msra.mxu0 0
    %255 = vmatprep.subr.bf16.mxu0 0
    %256 = vmatpush1.bf16.msra.mxu0 0
    %257 = vmatprep.subr.bf16.mxu0 0
    %258 = vmatpush1.bf16.msra.mxu0 0
    %259 = vmatprep.subr.bf16.mxu0 0
    %260 = vmatpush1.bf16.msra.mxu0 0
    %261 = vmatprep.subr.bf16.mxu0 0
    %262 = vmatpush1.bf16.msra.mxu0 0
    %263 = vmatprep.subr.bf16.mxu0 0
    %264 = vmatpush1.bf16.msra.mxu0 0
    %265 = vmatprep.subr.bf16.mxu0 0
    %266 = vmatpush1.bf16.msra.mxu0 0
    %267 = vmatprep.subr.bf16.mxu0 0
    %268 = vmatpush1.bf16.msra.mxu0 0
    %269 = vmatprep.subr.bf16.mxu0 0
    %270 = vmatpush1.bf16.msra.mxu0 0
    %271 = vmatprep.subr.bf16.mxu0 0
    %272 = vmatpush1.bf16.msra.mxu0 0
    %273 = vmatprep.subr.bf16.mxu0 0
    %274 = vmatpush1.bf16.msra.mxu0 0
    %275 = vmatprep.subr.bf16.mxu0 0
    %276 = vmatpush1.bf16.msra.mxu0 0
    %277 = vmatprep.subr.bf16.mxu0 0
    %278 = vmatpush1.bf16.msra.mxu0 0
    %279 = vmatprep.subr.bf16.mxu0 0
    %280 = vmatpush1.bf16.msra.mxu0 0
    %281 = vmatprep.mubr.bf16.mxu0 0
    %282 = vmatmul.mubr.bf16.gmra.mrb[0].mxu0 %v183
    %v283 = vpop.f32.mrb[0].mxu0
    %v284 = vadd.f32 %v235, %v283
    %v285 = vpop.f32.mrb[0].mxu0
    %v286 = vpop.f32.mrb[0].mxu0
    %v287 = vadd.f32 %v235, %v286
    %v288 = vpop.f32.mrb[0].mxu0
    %289 = vdwg.mxu0
    %v290 = vld [vmem:[%s6] sm:$0xf]
    %v291 = vld [vmem:[%s6 + $0x4] sm:$0xf]
    %v292 = vld [vmem:[%s6 + $0x8] sm:$0xf]
    %v293 = vld [vmem:[%s6 + $0xc] sm:$0xf]
    %v294 = vld [vmem:[#allocation8] sm:$0x1]
    %v296 = vlaneseq
    %v297 = vshrl.u32 %v296, 7
    %v298 = vsub.s32 0, %v297
    %v299 = vrot.slane %v294, %v298
    %v305 = vunpack.c.l.b16 %v290
    %v306 = vunpack.c.l.b16 %v291
    %v307 = vunpack.c.l.b16 %v292
    %v308 = vunpack.c.l.b16 %v293
    %v309 = vpack.c.b16 %v306, %v305
    %v310 = vpack.c.b16 %v308, %v307
    %313 = vmatprep.subr.bf16.mxu0 0
    %314 = vmatpush1.bf16.msra.mxu0 %v309
    %315 = vmatprep.subr.bf16.mxu0 0
    %316 = vmatpush1.bf16.msra.mxu0 %v310
    %317 = vmatprep.subr.bf16.mxu0 0
    %318 = vmatpush1.bf16.msra.mxu0 0
    %319 = vmatprep.subr.bf16.mxu0 0
    %320 = vmatpush1.bf16.msra.mxu0 0
    %321 = vmatprep.subr.bf16.mxu0 0
    %322 = vmatpush1.bf16.msra.mxu0 0
    %323 = vmatprep.subr.bf16.mxu0 0
    %324 = vmatpush1.bf16.msra.mxu0 0
    %325 = vmatprep.subr.bf16.mxu0 0
    %326 = vmatpush1.bf16.msra.mxu0 0
    %327 = vmatprep.subr.bf16.mxu0 0
    %328 = vmatpush1.bf16.msra.mxu0 0
    %329 = vmatprep.subr.bf16.mxu0 0
    %330 = vmatpush1.bf16.msra.mxu0 0
    %331 = vmatprep.subr.bf16.mxu0 0
    %332 = vmatpush1.bf16.msra.mxu0 0
    %333 = vmatprep.subr.bf16.mxu0 0
    %334 = vmatpush1.bf16.msra.mxu0 0
    %335 = vmatprep.subr.bf16.mxu0 0
    %336 = vmatpush1.bf16.msra.mxu0 0
    %337 = vmatprep.subr.bf16.mxu0 0
    %338 = vmatpush1.bf16.msra.mxu0 0
    %339 = vmatprep.subr.bf16.mxu0 0
    %340 = vmatpush1.bf16.msra.mxu0 0
    %341 = vmatprep.subr.bf16.mxu0 0
    %342 = vmatpush1.bf16.msra.mxu0 0
    %343 = vmatprep.subr.bf16.mxu0 0
    %344 = vmatpush1.bf16.msra.mxu0 0
    %345 = vmatprep.mubr.bf16.mxu0 0
    %346 = vmatmul.mubr.bf16.gmra.mrb[0].mxu0 %v183
    %v347 = vpop.f32.mrb[0].mxu0
    %v348 = vadd.f32 %v299, %v347
    %v349 = vpop.f32.mrb[0].mxu0
    %v350 = vpop.f32.mrb[0].mxu0
    %v351 = vadd.f32 %v299, %v350
    %v352 = vpop.f32.mrb[0].mxu0
    %353 = vdwg.mxu0
    %v354 = vmul.f32 %v220, 0.35355338
    %v355 = vmul.f32 %v223, 0.35355338
    %v356 = vpack.c.bf16 %v355, %v354
    %v357 = vpack.c.bf16 %v287, %v284
    %v358 = vpack.c.bf16 %v351, %v348
    %360 = vrot.lane.b32.xlu0 %v356, 120
    %v361 = vpop.permute.xlu0 %360
    %362 = vrot.lane.b32.xlu0 %v356, 112
    %v363 = vpop.permute.xlu0 %362
    %364 = vrot.lane.b32.xlu0 %v356, 104
    %v365 = vpop.permute.xlu0 %364
    %v366 = vrot.slane %v356, 4
    %367 = vrot.lane.b32.xlu0 %v366, 120
    %v368 = vpop.permute.xlu0 %367
    %369 = vrot.lane.b32.xlu0 %v366, 112
    %v370 = vpop.permute.xlu0 %369
    %371 = vrot.lane.b32.xlu0 %v366, 104
    %v372 = vpop.permute.xlu0 %371
    %374 = vrot.lane.b32.xlu0 %v357, 120
    %v375 = vpop.permute.xlu0 %374
    %376 = vrot.lane.b32.xlu0 %v357, 112
    %v377 = vpop.permute.xlu0 %376
    %378 = vrot.lane.b32.xlu0 %v357, 104
    %v379 = vpop.permute.xlu0 %378
    %v380 = vrot.slane %v357, 4
    %381 = vrot.lane.b32.xlu0 %v380, 120
    %v382 = vpop.permute.xlu0 %381
    %383 = vrot.lane.b32.xlu0 %v380, 112
    %v384 = vpop.permute.xlu0 %383
    %385 = vrot.lane.b32.xlu0 %v380, 104
    %v386 = vpop.permute.xlu0 %385
    %388 = vrot.lane.b32.xlu0 %v358, 120
    %v389 = vpop.permute.xlu0 %388
    %390 = vrot.lane.b32.xlu0 %v358, 112
    %v391 = vpop.permute.xlu0 %390
    %392 = vrot.lane.b32.xlu0 %v358, 104
    %v393 = vpop.permute.xlu0 %392
    %v394 = vrot.slane %v358, 4
    %395 = vrot.lane.b32.xlu0 %v394, 120
    %v396 = vpop.permute.xlu0 %395
    %397 = vrot.lane.b32.xlu0 %v394, 112
    %v398 = vpop.permute.xlu0 %397
    %399 = vrot.lane.b32.xlu0 %v394, 104
    %v400 = vpop.permute.xlu0 %399
    %v401 = vld [vmem:[#allocation2] sm:$0x1]
    %v402 = vld [vmem:[#allocation2 + $0x1] sm:$0x1]
    %v403 = vld [vmem:[#allocation2 + $0x2] sm:$0x1]
    %v404 = vld [vmem:[#allocation2 + $0x3] sm:$0x1]
    %v405 = vld [vmem:[#allocation2 + $0x4] sm:$0x1]
    %v406 = vld [vmem:[#allocation2 + $0x5] sm:$0x1]
    %v407 = vld [vmem:[#allocation2 + $0x6] sm:$0x1]
    %v408 = vld [vmem:[#allocation2 + $0x7] sm:$0x1]
    %v417 = vlaneseq
    %v418 = vshrl.u32 %v417, 7
    %v419 = vsub.s32 0, %v418
    %v420 = vrot.slane %v401, %v419
    %v421 = vlaneseq
    %v422 = vshrl.u32 %v421, 7
    %v423 = vsub.s32 0, %v422
    %v424 = vrot.slane %v402, %v423
    %v425 = vlaneseq
    %v426 = vshrl.u32 %v425, 7
    %v427 = vsub.s32 0, %v426
    %v428 = vrot.slane %v403, %v427
    %v429 = vlaneseq
    %v430 = vshrl.u32 %v429, 7
    %v431 = vsub.s32 0, %v430
    %v432 = vrot.slane %v404, %v431
    %v433 = vlaneseq
    %v434 = vshrl.u32 %v433, 7
    %v435 = vsub.s32 0, %v434
    %v436 = vrot.slane %v405, %v435
    %v437 = vlaneseq
    %v438 = vshrl.u32 %v437, 7
    %v439 = vsub.s32 0, %v438
    %v440 = vrot.slane %v406, %v439
    %v441 = vlaneseq
    %v442 = vshrl.u32 %v441, 7
    %v443 = vsub.s32 0, %v442
    %v444 = vrot.slane %v407, %v443
    %v445 = vlaneseq
    %v446 = vshrl.u32 %v445, 7
    %v447 = vsub.s32 0, %v446
    %v448 = vrot.slane %v408, %v447
    %vm457 = vcmask 64512
    %v459 = vsel %vm457, %v356, 0
    %v462 = vsel %vm457, %v357, 0
    %464 = vmatprep.subr.bf16.mxu0 0
    %465 = vmatpush1.bf16.xpose.msra.mxu0 %v462
    %466 = vmatprep.subr.bf16.mxu0 0
    %467 = vmatpush1.bf16.xpose.msra.mxu0 0
    %468 = vmatprep.subr.bf16.mxu0 0
    %469 = vmatpush1.bf16.xpose.msra.mxu0 0
    %470 = vmatprep.subr.bf16.mxu0 0
    %471 = vmatpush1.bf16.xpose.msra.mxu0 0
    %472 = vmatprep.subr.bf16.mxu0 0
    %473 = vmatpush1.bf16.xpose.msra.mxu0 0
    %474 = vmatprep.subr.bf16.mxu0 0
    %475 = vmatpush1.bf16.xpose.msra.mxu0 0
    %476 = vmatprep.subr.bf16.mxu0 0
    %477 = vmatpush1.bf16.xpose.msra.mxu0 0
    %478 = vmatprep.subr.bf16.mxu0 0
    %479 = vmatpush1.bf16.xpose.msra.mxu0 0
    %480 = vmatprep.subr.bf16.mxu0 0
    %481 = vmatpush1.bf16.xpose.msra.mxu0 0
    %482 = vmatprep.subr.bf16.mxu0 0
    %483 = vmatpush1.bf16.xpose.msra.mxu0 0
    %484 = vmatprep.subr.bf16.mxu0 0
    %485 = vmatpush1.bf16.xpose.msra.mxu0 0
    %486 = vmatprep.subr.bf16.mxu0 0
    %487 = vmatpush1.bf16.xpose.msra.mxu0 0
    %488 = vmatprep.subr.bf16.mxu0 0
    %489 = vmatpush1.bf16.xpose.msra.mxu0 0
    %490 = vmatprep.subr.bf16.mxu0 0
    %491 = vmatpush1.bf16.xpose.msra.mxu0 0
    %492 = vmatprep.subr.bf16.mxu0 0
    %493 = vmatpush1.bf16.xpose.msra.mxu0 0
    %494 = vmatprep.subr.bf16.mxu0 0
    %495 = vmatpush1.bf16.xpose.msra.mxu0 0
    %496 = vmatprep.mubr.bf16.mxu0 0
    %497 = vmatmul.mubr.bf16.gmra.mrb[0].mxu0 %v459
    %v498 = vpop.f32.mrb[0].mxu0
    %v499 = vadd.f32 %v420, %v498
    %v500 = vpop.f32.mrb[0].mxu0
    %v501 = vpop.f32.mrb[0].mxu0
    %v502 = vpop.f32.mrb[0].mxu0
    %503 = vdwg.mxu0
    %v505 = vsel %vm457, %v361, 0
    %v508 = vsel %vm457, %v375, 0
    %510 = vmatprep.subr.bf16.mxu0 0
    %511 = vmatpush1.bf16.xpose.msra.mxu0 %v508
    %512 = vmatprep.subr.bf16.mxu0 0
    %513 = vmatpush1.bf16.xpose.msra.mxu0 0
    %514 = vmatprep.subr.bf16.mxu0 0
    %515 = vmatpush1.bf16.xpose.msra.mxu0 0
    %516 = vmatprep.subr.bf16.mxu0 0
    %517 = vmatpush1.bf16.xpose.msra.mxu0 0
    %518 = vmatprep.subr.bf16.mxu0 0
    %519 = vmatpush1.bf16.xpose.msra.mxu0 0
    %520 = vmatprep.subr.bf16.mxu0 0
    %521 = vmatpush1.bf16.xpose.msra.mxu0 0
    %522 = vmatprep.subr.bf16.mxu0 0
    %523 = vmatpush1.bf16.xpose.msra.mxu0 0
    %524 = vmatprep.subr.bf16.mxu0 0
    %525 = vmatpush1.bf16.xpose.msra.mxu0 0
    %526 = vmatprep.subr.bf16.mxu0 0
    %527 = vmatpush1.bf16.xpose.msra.mxu0 0
    %528 = vmatprep.subr.bf16.mxu0 0
    %529 = vmatpush1.bf16.xpose.msra.mxu0 0
    %530 = vmatprep.subr.bf16.mxu0 0
    %531 = vmatpush1.bf16.xpose.msra.mxu0 0
    %532 = vmatprep.subr.bf16.mxu0 0
    %533 = vmatpush1.bf16.xpose.msra.mxu0 0
    %534 = vmatprep.subr.bf16.mxu0 0
    %535 = vmatpush1.bf16.xpose.msra.mxu0 0
    %536 = vmatprep.subr.bf16.mxu0 0
    %537 = vmatpush1.bf16.xpose.msra.mxu0 0
    %538 = vmatprep.subr.bf16.mxu0 0
    %539 = vmatpush1.bf16.xpose.msra.mxu0 0
    %540 = vmatprep.subr.bf16.mxu0 0
    %541 = vmatpush1.bf16.xpose.msra.mxu0 0
    %542 = vmatprep.mubr.bf16.mxu0 0
    %543 = vmatmul.mubr.bf16.gmra.mrb[0].mxu0 %v505
    %v544 = vpop.f32.mrb[0].mxu0
    %v545 = vadd.f32 %v424, %v544
    %v546 = vpop.f32.mrb[0].mxu0
    %v547 = vpop.f32.mrb[0].mxu0
    %v548 = vpop.f32.mrb[0].mxu0
    %549 = vdwg.mxu0
    %v551 = vsel %vm457, %v363, 0
    %v554 = vsel %vm457, %v377, 0
    %556 = vmatprep.subr.bf16.mxu0 0
    %557 = vmatpush1.bf16.xpose.msra.mxu0 %v554
    %558 = vmatprep.subr.bf16.mxu0 0
    %559 = vmatpush1.bf16.xpose.msra.mxu0 0
    %560 = vmatprep.subr.bf16.mxu0 0
    %561 = vmatpush1.bf16.xpose.msra.mxu0 0
    %562 = vmatprep.subr.bf16.mxu0 0
    %563 = vmatpush1.bf16.xpose.msra.mxu0 0
    %564 = vmatprep.subr.bf16.mxu0 0
    %565 = vmatpush1.bf16.xpose.msra.mxu0 0
    %566 = vmatprep.subr.bf16.mxu0 0
    %567 = vmatpush1.bf16.xpose.msra.mxu0 0
    %568 = vmatprep.subr.bf16.mxu0 0
    %569 = vmatpush1.bf16.xpose.msra.mxu0 0
    %570 = vmatprep.subr.bf16.mxu0 0
    %571 = vmatpush1.bf16.xpose.msra.mxu0 0
    %572 = vmatprep.subr.bf16.mxu0 0
    %573 = vmatpush1.bf16.xpose.msra.mxu0 0
    %574 = vmatprep.subr.bf16.mxu0 0
    %575 = vmatpush1.bf16.xpose.msra.mxu0 0
    %576 = vmatprep.subr.bf16.mxu0 0
    %577 = vmatpush1.bf16.xpose.msra.mxu0 0
    %578 = vmatprep.subr.bf16.mxu0 0
    %579 = vmatpush1.bf16.xpose.msra.mxu0 0
    %580 = vmatprep.subr.bf16.mxu0 0
    %581 = vmatpush1.bf16.xpose.msra.mxu0 0
    %582 = vmatprep.subr.bf16.mxu0 0
    %583 = vmatpush1.bf16.xpose.msra.mxu0 0
    %584 = vmatprep.subr.bf16.mxu0 0
    %585 = vmatpush1.bf16.xpose.msra.mxu0 0
    %586 = vmatprep.subr.bf16.mxu0 0
    %587 = vmatpush1.bf16.xpose.msra.mxu0 0
    %588 = vmatprep.mubr.bf16.mxu0 0
    %589 = vmatmul.mubr.bf16.gmra.mrb[0].mxu0 %v551
    %v590 = vpop.f32.mrb[0].mxu0
    %v591 = vadd.f32 %v428, %v590
    %v592 = vpop.f32.mrb[0].mxu0
    %v593 = vpop.f32.mrb[0].mxu0
    %v594 = vpop.f32.mrb[0].mxu0
    %595 = vdwg.mxu0
    %v597 = vsel %vm457, %v365, 0
    %v600 = vsel %vm457, %v379, 0
    %602 = vmatprep.subr.bf16.mxu0 0
    %603 = vmatpush1.bf16.xpose.msra.mxu0 %v600
    %604 = vmatprep.subr.bf16.mxu0 0
    %605 = vmatpush1.bf16.xpose.msra.mxu0 0
    %606 = vmatprep.subr.bf16.mxu0 0
    %607 = vmatpush1.bf16.xpose.msra.mxu0 0
    %608 = vmatprep.subr.bf16.mxu0 0
    %609 = vmatpush1.bf16.xpose.msra.mxu0 0
    %610 = vmatprep.subr.bf16.mxu0 0
    %611 = vmatpush1.bf16.xpose.msra.mxu0 0
    %612 = vmatprep.subr.bf16.mxu0 0
    %613 = vmatpush1.bf16.xpose.msra.mxu0 0
    %614 = vmatprep.subr.bf16.mxu0 0
    %615 = vmatpush1.bf16.xpose.msra.mxu0 0
    %616 = vmatprep.subr.bf16.mxu0 0
    %617 = vmatpush1.bf16.xpose.msra.mxu0 0
    %618 = vmatprep.subr.bf16.mxu0 0
    %619 = vmatpush1.bf16.xpose.msra.mxu0 0
    %620 = vmatprep.subr.bf16.mxu0 0
    %621 = vmatpush1.bf16.xpose.msra.mxu0 0
    %622 = vmatprep.subr.bf16.mxu0 0
    %623 = vmatpush1.bf16.xpose.msra.mxu0 0
    %624 = vmatprep.subr.bf16.mxu0 0
    %625 = vmatpush1.bf16.xpose.msra.mxu0 0
    %626 = vmatprep.subr.bf16.mxu0 0
    %627 = vmatpush1.bf16.xpose.msra.mxu0 0
    %628 = vmatprep.subr.bf16.mxu0 0
    %629 = vmatpush1.bf16.xpose.msra.mxu0 0
    %630 = vmatprep.subr.bf16.mxu0 0
    %631 = vmatpush1.bf16.xpose.msra.mxu0 0
    %632 = vmatprep.subr.bf16.mxu0 0
    %633 = vmatpush1.bf16.xpose.msra.mxu0 0
    %634 = vmatprep.mubr.bf16.mxu0 0
    %635 = vmatmul.mubr.bf16.gmra.mrb[0].mxu0 %v597
    %v636 = vpop.f32.mrb[0].mxu0
    %v637 = vadd.f32 %v432, %v636
    %v638 = vpop.f32.mrb[0].mxu0
    %v639 = vpop.f32.mrb[0].mxu0
    %v640 = vpop.f32.mrb[0].mxu0
    %641 = vdwg.mxu0
    %v643 = vsel %vm457, %v366, 0
    %v646 = vsel %vm457, %v380, 0
    %648 = vmatprep.subr.bf16.mxu0 0
    %649 = vmatpush1.bf16.xpose.msra.mxu0 %v646
    %650 = vmatprep.subr.bf16.mxu0 0
    %651 = vmatpush1.bf16.xpose.msra.mxu0 0
    %652 = vmatprep.subr.bf16.mxu0 0
    %653 = vmatpush1.bf16.xpose.msra.mxu0 0
    %654 = vmatprep.subr.bf16.mxu0 0
    %655 = vmatpush1.bf16.xpose.msra.mxu0 0
    %656 = vmatprep.subr.bf16.mxu0 0
    %657 = vmatpush1.bf16.xpose.msra.mxu0 0
    %658 = vmatprep.subr.bf16.mxu0 0
    %659 = vmatpush1.bf16.xpose.msra.mxu0 0
    %660 = vmatprep.subr.bf16.mxu0 0
    %661 = vmatpush1.bf16.xpose.msra.mxu0 0
    %662 = vmatprep.subr.bf16.mxu0 0
    %663 = vmatpush1.bf16.xpose.msra.mxu0 0
    %664 = vmatprep.subr.bf16.mxu0 0
    %665 = vmatpush1.bf16.xpose.msra.mxu0 0
    %666 = vmatprep.subr.bf16.mxu0 0
    %667 = vmatpush1.bf16.xpose.msra.mxu0 0
    %668 = vmatprep.subr.bf16.mxu0 0
    %669 = vmatpush1.bf16.xpose.msra.mxu0 0
    %670 = vmatprep.subr.bf16.mxu0 0
    %671 = vmatpush1.bf16.xpose.msra.mxu0 0
    %672 = vmatprep.subr.bf16.mxu0 0
    %673 = vmatpush1.bf16.xpose.msra.mxu0 0
    %674 = vmatprep.subr.bf16.mxu0 0
    %675 = vmatpush1.bf16.xpose.msra.mxu0 0
    %676 = vmatprep.subr.bf16.mxu0 0
    %677 = vmatpush1.bf16.xpose.msra.mxu0 0
    %678 = vmatprep.subr.bf16.mxu0 0
    %679 = vmatpush1.bf16.xpose.msra.mxu0 0
    %680 = vmatprep.mubr.bf16.mxu0 0
    %681 = vmatmul.mubr.bf16.gmra.mrb[0].mxu0 %v643
    %v682 = vpop.f32.mrb[0].mxu0
    %v683 = vadd.f32 %v436, %v682
    %v684 = vpop.f32.mrb[0].mxu0
    %v685 = vpop.f32.mrb[0].mxu0
    %v686 = vpop.f32.mrb[0].mxu0
    %687 = vdwg.mxu0
    %v689 = vsel %vm457, %v368, 0
    %v692 = vsel %vm457, %v382, 0
    %694 = vmatprep.subr.bf16.mxu0 0
    %695 = vmatpush1.bf16.xpose.msra.mxu0 %v692
    %696 = vmatprep.subr.bf16.mxu0 0
    %697 = vmatpush1.bf16.xpose.msra.mxu0 0
    %698 = vmatprep.subr.bf16.mxu0 0
    %699 = vmatpush1.bf16.xpose.msra.mxu0 0
    %700 = vmatprep.subr.bf16.mxu0 0
    %701 = vmatpush1.bf16.xpose.msra.mxu0 0
    %702 = vmatprep.subr.bf16.mxu0 0
    %703 = vmatpush1.bf16.xpose.msra.mxu0 0
    %704 = vmatprep.subr.bf16.mxu0 0
    %705 = vmatpush1.bf16.xpose.msra.mxu0 0
    %706 = vmatprep.subr.bf16.mxu0 0
    %707 = vmatpush1.bf16.xpose.msra.mxu0 0
    %708 = vmatprep.subr.bf16.mxu0 0
    %709 = vmatpush1.bf16.xpose.msra.mxu0 0
    %710 = vmatprep.subr.bf16.mxu0 0
    %711 = vmatpush1.bf16.xpose.msra.mxu0 0
    %712 = vmatprep.subr.bf16.mxu0 0
    %713 = vmatpush1.bf16.xpose.msra.mxu0 0
    %714 = vmatprep.subr.bf16.mxu0 0
    %715 = vmatpush1.bf16.xpose.msra.mxu0 0
    %716 = vmatprep.subr.bf16.mxu0 0
    %717 = vmatpush1.bf16.xpose.msra.mxu0 0
    %718 = vmatprep.subr.bf16.mxu0 0
    %719 = vmatpush1.bf16.xpose.msra.mxu0 0
    %720 = vmatprep.subr.bf16.mxu0 0
    %721 = vmatpush1.bf16.xpose.msra.mxu0 0
    %722 = vmatprep.subr.bf16.mxu0 0
    %723 = vmatpush1.bf16.xpose.msra.mxu0 0
    %724 = vmatprep.subr.bf16.mxu0 0
    %725 = vmatpush1.bf16.xpose.msra.mxu0 0
    %726 = vmatprep.mubr.bf16.mxu0 0
    %727 = vmatmul.mubr.bf16.gmra.mrb[0].mxu0 %v689
    %v728 = vpop.f32.mrb[0].mxu0
    %v729 = vadd.f32 %v440, %v728
    %v730 = vpop.f32.mrb[0].mxu0
    %v731 = vpop.f32.mrb[0].mxu0
    %v732 = vpop.f32.mrb[0].mxu0
    %733 = vdwg.mxu0
    %v735 = vsel %vm457, %v370, 0
    %v738 = vsel %vm457, %v384, 0
    %740 = vmatprep.subr.bf16.mxu0 0
    %741 = vmatpush1.bf16.xpose.msra.mxu0 %v738
    %742 = vmatprep.subr.bf16.mxu0 0
    %743 = vmatpush1.bf16.xpose.msra.mxu0 0
    %744 = vmatprep.subr.bf16.mxu0 0
    %745 = vmatpush1.bf16.xpose.msra.mxu0 0
    %746 = vmatprep.subr.bf16.mxu0 0
    %747 = vmatpush1.bf16.xpose.msra.mxu0 0
    %748 = vmatprep.subr.bf16.mxu0 0
    %749 = vmatpush1.bf16.xpose.msra.mxu0 0
    %750 = vmatprep.subr.bf16.mxu0 0
    %751 = vmatpush1.bf16.xpose.msra.mxu0 0
    %752 = vmatprep.subr.bf16.mxu0 0
    %753 = vmatpush1.bf16.xpose.msra.mxu0 0
    %754 = vmatprep.subr.bf16.mxu0 0
    %755 = vmatpush1.bf16.xpose.msra.mxu0 0
    %756 = vmatprep.subr.bf16.mxu0 0
    %757 = vmatpush1.bf16.xpose.msra.mxu0 0
    %758 = vmatprep.subr.bf16.mxu0 0
    %759 = vmatpush1.bf16.xpose.msra.mxu0 0
    %760 = vmatprep.subr.bf16.mxu0 0
    %761 = vmatpush1.bf16.xpose.msra.mxu0 0
    %762 = vmatprep.subr.bf16.mxu0 0
    %763 = vmatpush1.bf16.xpose.msra.mxu0 0
    %764 = vmatprep.subr.bf16.mxu0 0
    %765 = vmatpush1.bf16.xpose.msra.mxu0 0
    %766 = vmatprep.subr.bf16.mxu0 0
    %767 = vmatpush1.bf16.xpose.msra.mxu0 0
    %768 = vmatprep.subr.bf16.mxu0 0
    %769 = vmatpush1.bf16.xpose.msra.mxu0 0
    %770 = vmatprep.subr.bf16.mxu0 0
    %771 = vmatpush1.bf16.xpose.msra.mxu0 0
    %772 = vmatprep.mubr.bf16.mxu0 0
    %773 = vmatmul.mubr.bf16.gmra.mrb[0].mxu0 %v735
    %v774 = vpop.f32.mrb[0].mxu0
    %v775 = vadd.f32 %v444, %v774
    %v776 = vpop.f32.mrb[0].mxu0
    %v777 = vpop.f32.mrb[0].mxu0
    %v778 = vpop.f32.mrb[0].mxu0
    %779 = vdwg.mxu0
    %v781 = vsel %vm457, %v372, 0
    %v784 = vsel %vm457, %v386, 0
    %786 = vmatprep.subr.bf16.mxu0 0
    %787 = vmatpush1.bf16.xpose.msra.mxu0 %v784
    %788 = vmatprep.subr.bf16.mxu0 0
    %789 = vmatpush1.bf16.xpose.msra.mxu0 0
    %790 = vmatprep.subr.bf16.mxu0 0
    %791 = vmatpush1.bf16.xpose.msra.mxu0 0
    %792 = vmatprep.subr.bf16.mxu0 0
    %793 = vmatpush1.bf16.xpose.msra.mxu0 0
    %794 = vmatprep.subr.bf16.mxu0 0
    %795 = vmatpush1.bf16.xpose.msra.mxu0 0
    %796 = vmatprep.subr.bf16.mxu0 0
    %797 = vmatpush1.bf16.xpose.msra.mxu0 0
    %798 = vmatprep.subr.bf16.mxu0 0
    %799 = vmatpush1.bf16.xpose.msra.mxu0 0
    %800 = vmatprep.subr.bf16.mxu0 0
    %801 = vmatpush1.bf16.xpose.msra.mxu0 0
    %802 = vmatprep.subr.bf16.mxu0 0
    %803 = vmatpush1.bf16.xpose.msra.mxu0 0
    %804 = vmatprep.subr.bf16.mxu0 0
    %805 = vmatpush1.bf16.xpose.msra.mxu0 0
    %806 = vmatprep.subr.bf16.mxu0 0
    %807 = vmatpush1.bf16.xpose.msra.mxu0 0
    %808 = vmatprep.subr.bf16.mxu0 0
    %809 = vmatpush1.bf16.xpose.msra.mxu0 0
    %810 = vmatprep.subr.bf16.mxu0 0
    %811 = vmatpush1.bf16.xpose.msra.mxu0 0
    %812 = vmatprep.subr.bf16.mxu0 0
    %813 = vmatpush1.bf16.xpose.msra.mxu0 0
    %814 = vmatprep.subr.bf16.mxu0 0
    %815 = vmatpush1.bf16.xpose.msra.mxu0 0
    %816 = vmatprep.subr.bf16.mxu0 0
    %817 = vmatpush1.bf16.xpose.msra.mxu0 0
    %818 = vmatprep.mubr.bf16.mxu0 0
    %819 = vmatmul.mubr.bf16.gmra.mrb[0].mxu0 %v781
    %v820 = vpop.f32.mrb[0].mxu0
    %v821 = vadd.f32 %v448, %v820
    %v822 = vpop.f32.mrb[0].mxu0
    %v823 = vpop.f32.mrb[0].mxu0
    %v824 = vpop.f32.mrb[0].mxu0
    %825 = vdwg.mxu0
    %v826 = vsel %vm457, %v499, -inf
    %827 = vmax.xlane.f32.xlu0 %v826
    %v828 = vpop.xlane.xlu0 %827
    %v829 = vsel %vm457, %v545, -inf
    %830 = vmax.xlane.f32.xlu0 %v829
    %v831 = vpop.xlane.xlu0 %830
    %v832 = vsel %vm457, %v591, -inf
    %833 = vmax.xlane.f32.xlu0 %v832
    %v834 = vpop.xlane.xlu0 %833
    %v835 = vsel %vm457, %v637, -inf
    %836 = vmax.xlane.f32.xlu0 %v835
    %v837 = vpop.xlane.xlu0 %836
    %v838 = vsel %vm457, %v683, -inf
    %839 = vmax.xlane.f32.xlu0 %v838
    %v840 = vpop.xlane.xlu0 %839
    %v841 = vsel %vm457, %v729, -inf
    %842 = vmax.xlane.f32.xlu0 %v841
    %v843 = vpop.xlane.xlu0 %842
    %v844 = vsel %vm457, %v775, -inf
    %845 = vmax.xlane.f32.xlu0 %v844
    %v846 = vpop.xlane.xlu0 %845
    %v847 = vsel %vm457, %v821, -inf
    %848 = vmax.xlane.f32.xlu0 %v847
    %v849 = vpop.xlane.xlu0 %848
    %v850 = vsub.f32 %v499, %v828
    %v851 = vsub.f32 %v545, %v831
    %v852 = vsub.f32 %v591, %v834
    %v853 = vsub.f32 %v637, %v837
    %v854 = vsub.f32 %v683, %v840
    %v855 = vsub.f32 %v729, %v843
    %v856 = vsub.f32 %v775, %v846
    %v857 = vsub.f32 %v821, %v849
    %v858 = vmul.f32 %v850, 1.442695
    %v859 = vpow.pop %v858
    %v860 = vmul.f32 %v851, 1.442695
    %v861 = vpow.pop %v860
    %v862 = vmul.f32 %v852, 1.442695
    %v863 = vpow.pop %v862
    %v864 = vmul.f32 %v853, 1.442695
    %v865 = vpow.pop %v864
    %v866 = vmul.f32 %v854, 1.442695
    %v867 = vpow.pop %v866
    %v868 = vmul.f32 %v855, 1.442695
    %v869 = vpow.pop %v868
    %v870 = vmul.f32 %v856, 1.442695
    %v871 = vpow.pop %v870
    %v872 = vmul.f32 %v857, 1.442695
    %v873 = vpow.pop %v872
    %v874 = vsel %vm457, %v859, 0.0
    %875 = vadd.xlane.f32.xlu0 %v874
    %v876 = vpop.xlane.xlu0 %875
    %v877 = vsel %vm457, %v861, 0.0
    %878 = vadd.xlane.f32.xlu0 %v877
    %v879 = vpop.xlane.xlu0 %878
    %v880 = vsel %vm457, %v863, 0.0
    %881 = vadd.xlane.f32.xlu0 %v880
    %v882 = vpop.xlane.xlu0 %881
    %v883 = vsel %vm457, %v865, 0.0
    %884 = vadd.xlane.f32.xlu0 %v883
    %v885 = vpop.xlane.xlu0 %884
    %v886 = vsel %vm457, %v867, 0.0
    %887 = vadd.xlane.f32.xlu0 %v886
    %v888 = vpop.xlane.xlu0 %887
    %v889 = vsel %vm457, %v869, 0.0
    %890 = vadd.xlane.f32.xlu0 %v889
    %v891 = vpop.xlane.xlu0 %890
    %v892 = vsel %vm457, %v871, 0.0
    %893 = vadd.xlane.f32.xlu0 %v892
    %v894 = vpop.xlane.xlu0 %893
    %v895 = vsel %vm457, %v873, 0.0
    %896 = vadd.xlane.f32.xlu0 %v895
    %v897 = vpop.xlane.xlu0 %896
    %v898 = vrcp.pop %v876
    %v899 = vrcp.pop %v879
    %v900 = vrcp.pop %v882
    %v901 = vrcp.pop %v885
    %v902 = vrcp.pop %v888
    %v903 = vrcp.pop %v891
    %v904 = vrcp.pop %v894
    %v905 = vrcp.pop %v897
    %v906 = vmul.f32 %v859, %v898
    %v907 = vmul.f32 %v861, %v899
    %v908 = vmul.f32 %v863, %v900
    %v909 = vmul.f32 %v865, %v901
    %v910 = vmul.f32 %v867, %v902
    %v911 = vmul.f32 %v869, %v903
    %v912 = vmul.f32 %v871, %v904
    %v913 = vmul.f32 %v873, %v905
    %v914 = vpack.c.bf16 %v906, %v906
    %v915 = vpack.c.bf16 %v907, %v907
    %v916 = vpack.c.bf16 %v908, %v908
    %v917 = vpack.c.bf16 %v909, %v909
    %v918 = vpack.c.bf16 %v910, %v910
    %v919 = vpack.c.bf16 %v911, %v911
    %v920 = vpack.c.bf16 %v912, %v912
    %v921 = vpack.c.bf16 %v913, %v913
    %v923 = vsel %vm457, %v914, 0
    %vm925 = vcmask 1043456
    %v927 = vsel %vm925, %v358, 0
    %929 = vmatprep.subr.bf16.mxu0 0
    %930 = vmatpush1.bf16.msra.mxu0 %v927
    %931 = vmatprep.subr.bf16.mxu0 0
    %932 = vmatpush1.bf16.msra.mxu0 0
    %933 = vmatprep.subr.bf16.mxu0 0
    %934 = vmatpush1.bf16.msra.mxu0 0
    %935 = vmatprep.subr.bf16.mxu0 0
    %936 = vmatpush1.bf16.msra.mxu0 0
    %937 = vmatprep.subr.bf16.mxu0 0
    %938 = vmatpush1.bf16.msra.mxu0 0
    %939 = vmatprep.subr.bf16.mxu0 0
    %940 = vmatpush1.bf16.msra.mxu0 0
    %941 = vmatprep.subr.bf16.mxu0 0
    %942 = vmatpush1.bf16.msra.mxu0 0
    %943 = vmatprep.subr.bf16.mxu0 0
    %944 = vmatpush1.bf16.msra.mxu0 0
    %945 = vmatprep.subr.bf16.mxu0 0
    %946 = vmatpush1.bf16.msra.mxu0 0
    %947 = vmatprep.subr.bf16.mxu0 0
    %948 = vmatpush1.bf16.msra.mxu0 0
    %949 = vmatprep.subr.bf16.mxu0 0
    %950 = vmatpush1.bf16.msra.mxu0 0
    %951 = vmatprep.subr.bf16.mxu0 0
    %952 = vmatpush1.bf16.msra.mxu0 0
    %953 = vmatprep.subr.bf16.mxu0 0
    %954 = vmatpush1.bf16.msra.mxu0 0
    %955 = vmatprep.subr.bf16.mxu0 0
    %956 = vmatpush1.bf16.msra.mxu0 0
    %957 = vmatprep.subr.bf16.mxu0 0
    %958 = vmatpush1.bf16.msra.mxu0 0
    %959 = vmatprep.subr.bf16.mxu0 0
    %960 = vmatpush1.bf16.msra.mxu0 0
    %961 = vmatprep.mubr.bf16.mxu0 0
    %962 = vmatmul.mubr.bf16.gmra.mrb[0].mxu0 %v923
    %v963 = vpop.f32.mrb[0].mxu0
    %v964 = vadd.f32 0.0, %v963
    %v965 = vpop.f32.mrb[0].mxu0
    %v966 = vpop.f32.mrb[0].mxu0
    %v967 = vpop.f32.mrb[0].mxu0
    %968 = vdwg.mxu0
    %v970 = vsel %vm457, %v915, 0
    %v973 = vsel %vm925, %v389, 0
    %975 = vmatprep.subr.bf16.mxu0 0
    %976 = vmatpush1.bf16.msra.mxu0 %v973
    %977 = vmatprep.subr.bf16.mxu0 0
    %978 = vmatpush1.bf16.msra.mxu0 0
    %979 = vmatprep.subr.bf16.mxu0 0
    %980 = vmatpush1.bf16.msra.mxu0 0
    %981 = vmatprep.subr.bf16.mxu0 0
    %982 = vmatpush1.bf16.msra.mxu0 0
    %983 = vmatprep.subr.bf16.mxu0 0
    %984 = vmatpush1.bf16.msra.mxu0 0
    %985 = vmatprep.subr.bf16.mxu0 0
    %986 = vmatpush1.bf16.msra.mxu0 0
    %987 = vmatprep.subr.bf16.mxu0 0
    %988 = vmatpush1.bf16.msra.mxu0 0
    %989 = vmatprep.subr.bf16.mxu0 0
    %990 = vmatpush1.bf16.msra.mxu0 0
    %991 = vmatprep.subr.bf16.mxu0 0
    %992 = vmatpush1.bf16.msra.mxu0 0
    %993 = vmatprep.subr.bf16.mxu0 0
    %994 = vmatpush1.bf16.msra.mxu0 0
    %995 = vmatprep.subr.bf16.mxu0 0
    %996 = vmatpush1.bf16.msra.mxu0 0
    %997 = vmatprep.subr.bf16.mxu0 0
    %998 = vmatpush1.bf16.msra.mxu0 0
    %999 = vmatprep.subr.bf16.mxu0 0
    %1000 = vmatpush1.bf16.msra.mxu0 0
    %1001 = vmatprep.subr.bf16.mxu0 0
    %1002 = vmatpush1.bf16.msra.mxu0 0
    %1003 = vmatprep.subr.bf16.mxu0 0
    %1004 = vmatpush1.bf16.msra.mxu0 0
    %1005 = vmatprep.subr.bf16.mxu0 0
    %1006 = vmatpush1.bf16.msra.mxu0 0
    %1007 = vmatprep.mubr.bf16.mxu0 0
    %1008 = vmatmul.mubr.bf16.gmra.mrb[0].mxu0 %v970
    %v1009 = vpop.f32.mrb[0].mxu0
    %v1010 = vadd.f32 0.0, %v1009
    %v1011 = vpop.f32.mrb[0].mxu0
    %v1012 = vpop.f32.mrb[0].mxu0
    %v1013 = vpop.f32.mrb[0].mxu0
    %1014 = vdwg.mxu0
    %v1016 = vsel %vm457, %v916, 0
    %v1019 = vsel %vm925, %v391, 0
    %1021 = vmatprep.subr.bf16.mxu0 0
    %1022 = vmatpush1.bf16.msra.mxu0 %v1019
    %1023 = vmatprep.subr.bf16.mxu0 0
    %1024 = vmatpush1.bf16.msra.mxu0 0
    %1025 = vmatprep.subr.bf16.mxu0 0
    %1026 = vmatpush1.bf16.msra.mxu0 0
    %1027 = vmatprep.subr.bf16.mxu0 0
    %1028 = vmatpush1.bf16.msra.mxu0 0
    %1029 = vmatprep.subr.bf16.mxu0 0
    %1030 = vmatpush1.bf16.msra.mxu0 0
    %1031 = vmatprep.subr.bf16.mxu0 0
    %1032 = vmatpush1.bf16.msra.mxu0 0
    %1033 = vmatprep.subr.bf16.mxu0 0
    %1034 = vmatpush1.bf16.msra.mxu0 0
    %1035 = vmatprep.subr.bf16.mxu0 0
    %1036 = vmatpush1.bf16.msra.mxu0 0
    %1037 = vmatprep.subr.bf16.mxu0 0
    %1038 = vmatpush1.bf16.msra.mxu0 0
    %1039 = vmatprep.subr.bf16.mxu0 0
    %1040 = vmatpush1.bf16.msra.mxu0 0
    %1041 = vmatprep.subr.bf16.mxu0 0
    %1042 = vmatpush1.bf16.msra.mxu0 0
    %1043 = vmatprep.subr.bf16.mxu0 0
    %1044 = vmatpush1.bf16.msra.mxu0 0
    %1045 = vmatprep.subr.bf16.mxu0 0
    %1046 = vmatpush1.bf16.msra.mxu0 0
    %1047 = vmatprep.subr.bf16.mxu0 0
    %1048 = vmatpush1.bf16.msra.mxu0 0
    %1049 = vmatprep.subr.bf16.mxu0 0
    %1050 = vmatpush1.bf16.msra.mxu0 0
    %1051 = vmatprep.subr.bf16.mxu0 0
    %1052 = vmatpush1.bf16.msra.mxu0 0
    %1053 = vmatprep.mubr.bf16.mxu0 0
    %1054 = vmatmul.mubr.bf16.gmra.mrb[0].mxu0 %v1016
    %v1055 = vpop.f32.mrb[0].mxu0
    %v1056 = vadd.f32 0.0, %v1055
    %v1057 = vpop.f32.mrb[0].mxu0
    %v1058 = vpop.f32.mrb[0].mxu0
    %v1059 = vpop.f32.mrb[0].mxu0
    %1060 = vdwg.mxu0
    %v1062 = vsel %vm457, %v917, 0
    %v1065 = vsel %vm925, %v393, 0
    %1067 = vmatprep.subr.bf16.mxu0 0
    %1068 = vmatpush1.bf16.msra.mxu0 %v1065
    %1069 = vmatprep.subr.bf16.mxu0 0
    %1070 = vmatpush1.bf16.msra.mxu0 0
    %1071 = vmatprep.subr.bf16.mxu0 0
    %1072 = vmatpush1.bf16.msra.mxu0 0
    %1073 = vmatprep.subr.bf16.mxu0 0
    %1074 = vmatpush1.bf16.msra.mxu0 0
    %1075 = vmatprep.subr.bf16.mxu0 0
    %1076 = vmatpush1.bf16.msra.mxu0 0
    %1077 = vmatprep.subr.bf16.mxu0 0
    %1078 = vmatpush1.bf16.msra.mxu0 0
    %1079 = vmatprep.subr.bf16.mxu0 0
    %1080 = vmatpush1.bf16.msra.mxu0 0
    %1081 = vmatprep.subr.bf16.mxu0 0
    %1082 = vmatpush1.bf16.msra.mxu0 0
    %1083 = vmatprep.subr.bf16.mxu0 0
    %1084 = vmatpush1.bf16.msra.mxu0 0
    %1085 = vmatprep.subr.bf16.mxu0 0
    %1086 = vmatpush1.bf16.msra.mxu0 0
    %1087 = vmatprep.subr.bf16.mxu0 0
    %1088 = vmatpush1.bf16.msra.mxu0 0
    %1089 = vmatprep.subr.bf16.mxu0 0
    %1090 = vmatpush1.bf16.msra.mxu0 0
    %1091 = vmatprep.subr.bf16.mxu0 0
    %1092 = vmatpush1.bf16.msra.mxu0 0
    %1093 = vmatprep.subr.bf16.mxu0 0
    %1094 = vmatpush1.bf16.msra.mxu0 0
    %1095 = vmatprep.subr.bf16.mxu0 0
    %1096 = vmatpush1.bf16.msra.mxu0 0
    %1097 = vmatprep.subr.bf16.mxu0 0
    %1098 = vmatpush1.bf16.msra.mxu0 0
    %1099 = vmatprep.mubr.bf16.mxu0 0
    %1100 = vmatmul.mubr.bf16.gmra.mrb[0].mxu0 %v1062
    %v1101 = vpop.f32.mrb[0].mxu0
    %v1102 = vadd.f32 0.0, %v1101
    %v1103 = vpop.f32.mrb[0].mxu0
    %v1104 = vpop.f32.mrb[0].mxu0
    %v1105 = vpop.f32.mrb[0].mxu0
    %1106 = vdwg.mxu0
    %v1108 = vsel %vm457, %v918, 0
    %v1111 = vsel %vm925, %v394, 0
    %1113 = vmatprep.subr.bf16.mxu0 0
    %1114 = vmatpush1.bf16.msra.mxu0 %v1111
    %1115 = vmatprep.subr.bf16.mxu0 0
    %1116 = vmatpush1.bf16.msra.mxu0 0
    %1117 = vmatprep.subr.bf16.mxu0 0
    %1118 = vmatpush1.bf16.msra.mxu0 0
    %1119 = vmatprep.subr.bf16.mxu0 0
    %1120 = vmatpush1.bf16.msra.mxu0 0
    %1121 = vmatprep.subr.bf16.mxu0 0
    %1122 = vmatpush1.bf16.msra.mxu0 0
    %1123 = vmatprep.subr.bf16.mxu0 0
    %1124 = vmatpush1.bf16.msra.mxu0 0
    %1125 = vmatprep.subr.bf16.mxu0 0
    %1126 = vmatpush1.bf16.msra.mxu0 0
    %1127 = vmatprep.subr.bf16.mxu0 0
    %1128 = vmatpush1.bf16.msra.mxu0 0
    %1129 = vmatprep.subr.bf16.mxu0 0
    %1130 = vmatpush1.bf16.msra.mxu0 0
    %1131 = vmatprep.subr.bf16.mxu0 0
    %1132 = vmatpush1.bf16.msra.mxu0 0
    %1133 = vmatprep.subr.bf16.mxu0 0
    %1134 = vmatpush1.bf16.msra.mxu0 0
    %1135 = vmatprep.subr.bf16.mxu0 0
    %1136 = vmatpush1.bf16.msra.mxu0 0
    %1137 = vmatprep.subr.bf16.mxu0 0
    %1138 = vmatpush1.bf16.msra.mxu0 0
    %1139 = vmatprep.subr.bf16.mxu0 0
    %1140 = vmatpush1.bf16.msra.mxu0 0
    %1141 = vmatprep.subr.bf16.mxu0 0
    %1142 = vmatpush1.bf16.msra.mxu0 0
    %1143 = vmatprep.subr.bf16.mxu0 0
    %1144 = vmatpush1.bf16.msra.mxu0 0
    %1145 = vmatprep.mubr.bf16.mxu0 0
    %1146 = vmatmul.mubr.bf16.gmra.mrb[0].mxu0 %v1108
    %v1147 = vpop.f32.mrb[0].mxu0
    %v1148 = vadd.f32 0.0, %v1147
    %v1149 = vpop.f32.mrb[0].mxu0
    %v1150 = vpop.f32.mrb[0].mxu0
    %v1151 = vpop.f32.mrb[0].mxu0
    %1152 = vdwg.mxu0
    %v1154 = vsel %vm457, %v919, 0
    %v1157 = vsel %vm925, %v396, 0
    %1159 = vmatprep.subr.bf16.mxu0 0
    %1160 = vmatpush1.bf16.msra.mxu0 %v1157
    %1161 = vmatprep.subr.bf16.mxu0 0
    %1162 = vmatpush1.bf16.msra.mxu0 0
    %1163 = vmatprep.subr.bf16.mxu0 0
    %1164 = vmatpush1.bf16.msra.mxu0 0
    %1165 = vmatprep.subr.bf16.mxu0 0
    %1166 = vmatpush1.bf16.msra.mxu0 0
    %1167 = vmatprep.subr.bf16.mxu0 0
    %1168 = vmatpush1.bf16.msra.mxu0 0
    %1169 = vmatprep.subr.bf16.mxu0 0
    %1170 = vmatpush1.bf16.msra.mxu0 0
    %1171 = vmatprep.subr.bf16.mxu0 0
    %1172 = vmatpush1.bf16.msra.mxu0 0
    %1173 = vmatprep.subr.bf16.mxu0 0
    %1174 = vmatpush1.bf16.msra.mxu0 0
    %1175 = vmatprep.subr.bf16.mxu0 0
    %1176 = vmatpush1.bf16.msra.mxu0 0
    %1177 = vmatprep.subr.bf16.mxu0 0
    %1178 = vmatpush1.bf16.msra.mxu0 0
    %1179 = vmatprep.subr.bf16.mxu0 0
    %1180 = vmatpush1.bf16.msra.mxu0 0
    %1181 = vmatprep.subr.bf16.mxu0 0
    %1182 = vmatpush1.bf16.msra.mxu0 0
    %1183 = vmatprep.subr.bf16.mxu0 0
    %1184 = vmatpush1.bf16.msra.mxu0 0
    %1185 = vmatprep.subr.bf16.mxu0 0
    %1186 = vmatpush1.bf16.msra.mxu0 0
    %1187 = vmatprep.subr.bf16.mxu0 0
    %1188 = vmatpush1.bf16.msra.mxu0 0
    %1189 = vmatprep.subr.bf16.mxu0 0
    %1190 = vmatpush1.bf16.msra.mxu0 0
    %1191 = vmatprep.mubr.bf16.mxu0 0
    %1192 = vmatmul.mubr.bf16.gmra.mrb[0].mxu0 %v1154
    %v1193 = vpop.f32.mrb[0].mxu0
    %v1194 = vadd.f32 0.0, %v1193
    %v1195 = vpop.f32.mrb[0].mxu0
    %v1196 = vpop.f32.mrb[0].mxu0
    %v1197 = vpop.f32.mrb[0].mxu0
    %1198 = vdwg.mxu0
    %v1200 = vsel %vm457, %v920, 0
    %v1203 = vsel %vm925, %v398, 0
    %1205 = vmatprep.subr.bf16.mxu0 0
    %1206 = vmatpush1.bf16.msra.mxu0 %v1203
    %1207 = vmatprep.subr.bf16.mxu0 0
    %1208 = vmatpush1.bf16.msra.mxu0 0
    %1209 = vmatprep.subr.bf16.mxu0 0
    %1210 = vmatpush1.bf16.msra.mxu0 0
    %1211 = vmatprep.subr.bf16.mxu0 0
    %1212 = vmatpush1.bf16.msra.mxu0 0
    %1213 = vmatprep.subr.bf16.mxu0 0
    %1214 = vmatpush1.bf16.msra.mxu0 0
    %1215 = vmatprep.subr.bf16.mxu0 0
    %1216 = vmatpush1.bf16.msra.mxu0 0
    %1217 = vmatprep.subr.bf16.mxu0 0
    %1218 = vmatpush1.bf16.msra.mxu0 0
    %1219 = vmatprep.subr.bf16.mxu0 0
    %1220 = vmatpush1.bf16.msra.mxu0 0
    %1221 = vmatprep.subr.bf16.mxu0 0
    %1222 = vmatpush1.bf16.msra.mxu0 0
    %1223 = vmatprep.subr.bf16.mxu0 0
    %1224 = vmatpush1.bf16.msra.mxu0 0
    %1225 = vmatprep.subr.bf16.mxu0 0
    %1226 = vmatpush1.bf16.msra.mxu0 0
    %1227 = vmatprep.subr.bf16.mxu0 0
    %1228 = vmatpush1.bf16.msra.mxu0 0
    %1229 = vmatprep.subr.bf16.mxu0 0
    %1230 = vmatpush1.bf16.msra.mxu0 0
    %1231 = vmatprep.subr.bf16.mxu0 0
    %1232 = vmatpush1.bf16.msra.mxu0 0
    %1233 = vmatprep.subr.bf16.mxu0 0
    %1234 = vmatpush1.bf16.msra.mxu0 0
    %1235 = vmatprep.subr.bf16.mxu0 0
    %1236 = vmatpush1.bf16.msra.mxu0 0
    %1237 = vmatprep.mubr.bf16.mxu0 0
    %1238 = vmatmul.mubr.bf16.gmra.mrb[0].mxu0 %v1200
    %v1239 = vpop.f32.mrb[0].mxu0
    %v1240 = vadd.f32 0.0, %v1239
    %v1241 = vpop.f32.mrb[0].mxu0
    %v1242 = vpop.f32.mrb[0].mxu0
    %v1243 = vpop.f32.mrb[0].mxu0
    %1244 = vdwg.mxu0
    %v1246 = vsel %vm457, %v921, 0
    %v1249 = vsel %vm925, %v400, 0
    %1251 = vmatprep.subr.bf16.mxu0 0
    %1252 = vmatpush1.bf16.msra.mxu0 %v1249
    %1253 = vmatprep.subr.bf16.mxu0 0
    %1254 = vmatpush1.bf16.msra.mxu0 0
    %1255 = vmatprep.subr.bf16.mxu0 0
    %1256 = vmatpush1.bf16.msra.mxu0 0
    %1257 = vmatprep.subr.bf16.mxu0 0
    %1258 = vmatpush1.bf16.msra.mxu0 0
    %1259 = vmatprep.subr.bf16.mxu0 0
    %1260 = vmatpush1.bf16.msra.mxu0 0
    %1261 = vmatprep.subr.bf16.mxu0 0
    %1262 = vmatpush1.bf16.msra.mxu0 0
    %1263 = vmatprep.subr.bf16.mxu0 0
    %1264 = vmatpush1.bf16.msra.mxu0 0
    %1265 = vmatprep.subr.bf16.mxu0 0
    %1266 = vmatpush1.bf16.msra.mxu0 0
    %1267 = vmatprep.subr.bf16.mxu0 0
    %1268 = vmatpush1.bf16.msra.mxu0 0
    %1269 = vmatprep.subr.bf16.mxu0 0
    %1270 = vmatpush1.bf16.msra.mxu0 0
    %1271 = vmatprep.subr.bf16.mxu0 0
    %1272 = vmatpush1.bf16.msra.mxu0 0
    %1273 = vmatprep.subr.bf16.mxu0 0
    %1274 = vmatpush1.bf16.msra.mxu0 0
    %1275 = vmatprep.subr.bf16.mxu0 0
    %1276 = vmatpush1.bf16.msra.mxu0 0
    %1277 = vmatprep.subr.bf16.mxu0 0
    %1278 = vmatpush1.bf16.msra.mxu0 0
    %1279 = vmatprep.subr.bf16.mxu0 0
    %1280 = vmatpush1.bf16.msra.mxu0 0
    %1281 = vmatprep.subr.bf16.mxu0 0
    %1282 = vmatpush1.bf16.msra.mxu0 0
    %1283 = vmatprep.mubr.bf16.mxu0 0
    %1284 = vmatmul.mubr.bf16.gmra.mrb[0].mxu0 %v1246
    %v1285 = vpop.f32.mrb[0].mxu0
    %v1286 = vadd.f32 0.0, %v1285
    %v1287 = vpop.f32.mrb[0].mxu0
    %v1288 = vpop.f32.mrb[0].mxu0
    %v1289 = vpop.f32.mrb[0].mxu0
    %1290 = vdwg.mxu0
    %1292 = vrot.lane.b32.xlu0 %v1010, 8
    %v1293 = vpop.permute.xlu0 %1292
    %1296 = vrot.lane.b32.xlu0 %v1056, 16
    %v1297 = vpop.permute.xlu0 %1296
    %1300 = vrot.lane.b32.xlu0 %v1102, 24
    %v1301 = vpop.permute.xlu0 %1300
    %v1303 = vsel %vm457, %v964, %v1293
    %vm1304 = vcmask 130048
    %v1305 = vsel %vm1304, %v1303, %v1297
    %vm1306 = vcmask 195584
    %v1307 = vsel %vm1306, %v1305, %v1301
    %1309 = vrot.lane.b32.xlu0 %v1194, 8
    %v1310 = vpop.permute.xlu0 %1309
    %1313 = vrot.lane.b32.xlu0 %v1240, 16
    %v1314 = vpop.permute.xlu0 %1313
    %1317 = vrot.lane.b32.xlu0 %v1286, 24
    %v1318 = vpop.permute.xlu0 %1317
    %v1320 = vsel %vm457, %v1148, %v1310
    %v1321 = vsel %vm1304, %v1320, %v1314
    %v1322 = vsel %vm1306, %v1321, %v1318
    %v1323 = vpack.c.bf16 %v1322, %v1307
    %v1324 = vld [vmem:[%s10] sm:$0xf]
    %v1325 = vld [vmem:[%s10 + $0x4] sm:$0xf]
    %v1326 = vld [vmem:[%s10 + $0x8] sm:$0xf]
    %v1327 = vld [vmem:[%s10 + $0xc] sm:$0xf]
    %v1328 = vld [vmem:[%s11] sm:$0x1]
    %v1330 = vlaneseq
    %v1331 = vshrl.u32 %v1330, 7
    %v1332 = vsub.s32 0, %v1331
    %v1333 = vrot.slane %v1328, %v1332
    %v1339 = vunpack.c.l.b16 %v1324
    %v1340 = vunpack.c.l.b16 %v1325
    %v1341 = vunpack.c.l.b16 %v1326
    %v1342 = vunpack.c.l.b16 %v1327
    %v1343 = vpack.c.b16 %v1340, %v1339
    %v1344 = vpack.c.b16 %v1342, %v1341
    %v1348 = vsel %vm114, %v1323, 0
    %1350 = vmatprep.subr.bf16.mxu0 0
    %1351 = vmatpush1.bf16.msra.mxu0 %v1343
    %1352 = vmatprep.subr.bf16.mxu0 0
    %1353 = vmatpush1.bf16.msra.mxu0 %v1344
    %1354 = vmatprep.subr.bf16.mxu0 0
    %1355 = vmatpush1.bf16.msra.mxu0 0
    %1356 = vmatprep.subr.bf16.mxu0 0
    %1357 = vmatpush1.bf16.msra.mxu0 0
    %1358 = vmatprep.subr.bf16.mxu0 0
    %1359 = vmatpush1.bf16.msra.mxu0 0
    %1360 = vmatprep.subr.bf16.mxu0 0
    %1361 = vmatpush1.bf16.msra.mxu0 0
    %1362 = vmatprep.subr.bf16.mxu0 0
    %1363 = vmatpush1.bf16.msra.mxu0 0
    %1364 = vmatprep.subr.bf16.mxu0 0
    %1365 = vmatpush1.bf16.msra.mxu0 0
    %1366 = vmatprep.subr.bf16.mxu0 0
    %1367 = vmatpush1.bf16.msra.mxu0 0
    %1368 = vmatprep.subr.bf16.mxu0 0
    %1369 = vmatpush1.bf16.msra.mxu0 0
    %1370 = vmatprep.subr.bf16.mxu0 0
    %1371 = vmatpush1.bf16.msra.mxu0 0
    %1372 = vmatprep.subr.bf16.mxu0 0
    %1373 = vmatpush1.bf16.msra.mxu0 0
    %1374 = vmatprep.subr.bf16.mxu0 0
    %1375 = vmatpush1.bf16.msra.mxu0 0
    %1376 = vmatprep.subr.bf16.mxu0 0
    %1377 = vmatpush1.bf16.msra.mxu0 0
    %1378 = vmatprep.subr.bf16.mxu0 0
    %1379 = vmatpush1.bf16.msra.mxu0 0
    %1380 = vmatprep.subr.bf16.mxu0 0
    %1381 = vmatpush1.bf16.msra.mxu0 0
    %1382 = vmatprep.mubr.bf16.mxu0 0
    %1383 = vmatmul.mubr.bf16.gmra.mrb[0].mxu0 %v1348
    %v1384 = vpop.f32.mrb[0].mxu0
    %v1385 = vadd.f32 %v1333, %v1384
    %v1386 = vpop.f32.mrb[0].mxu0
    %v1387 = vpop.f32.mrb[0].mxu0
    %v1388 = vadd.f32 %v1333, %v1387
    %v1389 = vpop.f32.mrb[0].mxu0
    %1390 = vdwg.mxu0
    %v1391 = vadd.f32 %v110, %v1385
    %v1392 = vadd.f32 %v111, %v1388
    %v1393 = vld [vmem:[%s12] sm:$0x1]
    %v1394 = vld [vmem:[%s13] sm:$0x1]
    %v1395 = vsel %vm114, %v1391, 0.0
    %1396 = vadd.xlane.f32.xlu0 %v1395
    %v1397 = vpop.xlane.xlu0 %1396
    %v1398 = vsel %vm114, %v1392, 0.0
    %1399 = vadd.xlane.f32.xlu0 %v1398
    %v1400 = vpop.xlane.xlu0 %1399
    %v1401 = vmul.f32 %v1397, %v121
    %v1402 = vmul.f32 %v1400, %v121
    %v1403 = vsub.f32 %v1391, %v1401
    %v1404 = vsub.f32 %v1392, %v1402
    %v1405 = vmul.f32 %v1403, %v1403
    %v1406 = vmul.f32 %v1404, %v1404
    %v1407 = vsel %vm114, %v1405, 0.0
    %1408 = vadd.xlane.f32.xlu0 %v1407
    %v1409 = vpop.xlane.xlu0 %1408
    %v1410 = vsel %vm114, %v1406, 0.0
    %1411 = vadd.xlane.f32.xlu0 %v1410
    %v1412 = vpop.xlane.xlu0 %1411
    %v1413 = vmul.f32 %v1409, %v121
    %v1414 = vmul.f32 %v1412, %v121
    %v1415 = vadd.f32 %v1413, 1e-05
    %v1416 = vadd.f32 %v1414, 1e-05
    %v1417 = vrsqrt.pop %v1415
    %v1418 = vrsqrt.pop %v1416
    %v1419 = vmul.f32 %v1403, %v1417
    %v1420 = vmul.f32 %v1404, %v1418
    %v1422 = vlaneseq
    %v1423 = vshrl.u32 %v1422, 7
    %v1424 = vsub.s32 0, %v1423
    %v1425 = vrot.slane %v1393, %v1424
    %v1427 = vmul.f32 %v1419, %v1425
    %v1428 = vmul.f32 %v1420, %v1425
    %v1430 = vlaneseq
    %v1431 = vshrl.u32 %v1430, 7
    %v1432 = vsub.s32 0, %v1431
    %v1433 = vrot.slane %v1394, %v1432
    %v1435 = vadd.f32 %v1427, %v1433
    %v1436 = vadd.f32 %v1428, %v1433
    %v1437 = vpack.c.bf16 %v1436, %v1435
    %v1438 = vld [vmem:[%s14] sm:$0xf]
    %v1439 = vld [vmem:[%s14 + $0x4] sm:$0xf]
    %v1440 = vld [vmem:[%s14 + $0x8] sm:$0xf]
    %v1441 = vld [vmem:[%s14 + $0xc] sm:$0xf]
    %v1442 = vld [vmem:[%s15] sm:$0x1]
    %v1444 = vlaneseq
    %v1445 = vshrl.u32 %v1444, 7
    %v1446 = vsub.s32 0, %v1445
    %v1447 = vrot.slane %v1442, %v1446
    %v1453 = vunpack.c.l.b16 %v1438
    %v1454 = vunpack.c.l.b16 %v1439
    %v1455 = vunpack.c.l.b16 %v1440
    %v1456 = vunpack.c.l.b16 %v1441
    %v1457 = vpack.c.b16 %v1454, %v1453
    %v1458 = vpack.c.b16 %v1456, %v1455
    %v1462 = vsel %vm114, %v1437, 0
    %1464 = vmatprep.subr.bf16.mxu0 0
    %1465 = vmatpush1.bf16.msra.mxu0 %v1457
    %1466 = vmatprep.subr.bf16.mxu0 0
    %1467 = vmatpush1.bf16.msra.mxu0 %v1458
    %1468 = vmatprep.subr.bf16.mxu0 0
    %1469 = vmatpush1.bf16.msra.mxu0 0
    %1470 = vmatprep.subr.bf16.mxu0 0
    %1471 = vmatpush1.bf16.msra.mxu0 0
    %1472 = vmatprep.subr.bf16.mxu0 0
    %1473 = vmatpush1.bf16.msra.mxu0 0
    %1474 = vmatprep.subr.bf16.mxu0 0
    %1475 = vmatpush1.bf16.msra.mxu0 0
    %1476 = vmatprep.subr.bf16.mxu0 0
    %1477 = vmatpush1.bf16.msra.mxu0 0
    %1478 = vmatprep.subr.bf16.mxu0 0
    %1479 = vmatpush1.bf16.msra.mxu0 0
    %1480 = vmatprep.subr.bf16.mxu0 0
    %1481 = vmatpush1.bf16.msra.mxu0 0
    %1482 = vmatprep.subr.bf16.mxu0 0
    %1483 = vmatpush1.bf16.msra.mxu0 0
    %1484 = vmatprep.subr.bf16.mxu0 0
    %1485 = vmatpush1.bf16.msra.mxu0 0
    %1486 = vmatprep.subr.bf16.mxu0 0
    %1487 = vmatpush1.bf16.msra.mxu0 0
    %1488 = vmatprep.subr.bf16.mxu0 0
    %1489 = vmatpush1.bf16.msra.mxu0 0
    %1490 = vmatprep.subr.bf16.mxu0 0
    %1491 = vmatpush1.bf16.msra.mxu0 0
    %1492 = vmatprep.subr.bf16.mxu0 0
    %1493 = vmatpush1.bf16.msra.mxu0 0
    %1494 = vmatprep.subr.bf16.mxu0 0
    %1495 = vmatpush1.bf16.msra.mxu0 0
    %1496 = vmatprep.mubr.bf16.mxu0 0
    %1497 = vmatmul.mubr.bf16.gmra.mrb[0].mxu0 %v1462
    %v1498 = vpop.f32.mrb[0].mxu0
    %v1499 = vadd.f32 %v1447, %v1498
    %v1500 = vpop.f32.mrb[0].mxu0
    %v1501 = vpop.f32.mrb[0].mxu0
    %v1502 = vadd.f32 %v1447, %v1501
    %v1503 = vpop.f32.mrb[0].mxu0
    %1504 = vdwg.mxu0
    %v1505 = vmul.f32 %v1499, 1.702
    %v1506 = vmul.f32 %v1502, 1.702
    %v1507 = vxor.u32 %v1505, 2147483648
    %v1508 = vxor.u32 %v1506, 2147483648
    %v1509 = vmul.f32 %v1507, 1.442695
    %v1510 = vpow.pop %v1509
    %v1511 = vmul.f32 %v1508, 1.442695
    %v1512 = vpow.pop %v1511
    %v1513 = vadd.f32 %v1510, 1.0
    %v1514 = vadd.f32 %v1512, 1.0
    %v1515 = vrcp.pop %v1513
    %v1516 = vmul.f32 1.0, %v1515
    %v1517 = vrcp.pop %v1514
    %v1518 = vmul.f32 1.0, %v1517
    %v1519 = vmul.f32 %v1499, %v1516
    %v1520 = vmul.f32 %v1502, %v1518
    %v1521 = vpack.c.bf16 %v1520, %v1519
    %v1522 = vld [vmem:[%s16] sm:$0xf]
    %v1523 = vld [vmem:[%s16 + $0x4] sm:$0xf]
    %v1524 = vld [vmem:[%s16 + $0x8] sm:$0xf]
    %v1525 = vld [vmem:[%s16 + $0xc] sm:$0xf]
    %v1526 = vld [vmem:[%s16 + $0x10] sm:$0xf]
    %v1527 = vld [vmem:[%s16 + $0x14] sm:$0xf]
    %v1528 = vld [vmem:[%s16 + $0x18] sm:$0xf]
    %v1529 = vld [vmem:[%s16 + $0x1c] sm:$0xf]
    %v1530 = vld [vmem:[%s16 + $0x20] sm:$0xf]
    %v1531 = vld [vmem:[%s16 + $0x24] sm:$0xf]
    %v1532 = vld [vmem:[%s16 + $0x28] sm:$0xf]
    %v1533 = vld [vmem:[%s16 + $0x2c] sm:$0xf]
    %v1534 = vld [vmem:[%s16 + $0x30] sm:$0xf]
    %v1535 = vld [vmem:[%s16 + $0x34] sm:$0xf]
    %v1536 = vld [vmem:[%s16 + $0x38] sm:$0xf]
    %v1537 = vld [vmem:[%s16 + $0x3c] sm:$0xf]
    %v1538 = vld [vmem:[%s17] sm:$0x1]
    %v1540 = vlaneseq
    %v1541 = vshrl.u32 %v1540, 7
    %v1542 = vsub.s32 0, %v1541
    %v1543 = vrot.slane %v1538, %v1542
    %v1561 = vunpack.c.l.b16 %v1522
    %v1562 = vunpack.c.l.b16 %v1523
    %v1563 = vunpack.c.l.b16 %v1524
    %v1564 = vunpack.c.l.b16 %v1525
    %v1565 = vunpack.c.l.b16 %v1526
    %v1566 = vunpack.c.l.b16 %v1527
    %v1567 = vunpack.c.l.b16 %v1528
    %v1568 = vunpack.c.l.b16 %v1529
    %v1569 = vunpack.c.l.b16 %v1530
    %v1570 = vunpack.c.l.b16 %v1531
    %v1571 = vunpack.c.l.b16 %v1532
    %v1572 = vunpack.c.l.b16 %v1533
    %v1573 = vunpack.c.l.b16 %v1534
    %v1574 = vunpack.c.l.b16 %v1535
    %v1575 = vunpack.c.l.b16 %v1536
    %v1576 = vunpack.c.l.b16 %v1537
    %v1577 = vpack.c.b16 %v1562, %v1561
    %v1578 = vpack.c.b16 %v1564, %v1563
    %v1579 = vpack.c.b16 %v1566, %v1565
    %v1580 = vpack.c.b16 %v1568, %v1567
    %v1581 = vpack.c.b16 %v1570, %v1569
    %v1582 = vpack.c.b16 %v1572, %v1571
    %v1583 = vpack.c.b16 %v1574, %v1573
    %v1584 = vpack.c.b16 %v1576, %v1575
    %1593 = vmatprep.subr.bf16.mxu0 0
    %1594 = vmatpush1.bf16.msra.mxu0 %v1577
    %1595 = vmatprep.subr.bf16.mxu0 0
    %1596 = vmatpush1.bf16.msra.mxu0 %v1578
    %1597 = vmatprep.subr.bf16.mxu0 0
    %1598 = vmatpush1.bf16.msra.mxu0 %v1579
    %1599 = vmatprep.subr.bf16.mxu0 0
    %1600 = vmatpush1.bf16.msra.mxu0 %v1580
    %1601 = vmatprep.subr.bf16.mxu0 0
    %1602 = vmatpush1.bf16.msra.mxu0 %v1581
    %1603 = vmatprep.subr.bf16.mxu0 0
    %1604 = vmatpush1.bf16.msra.mxu0 %v1582
    %1605 = vmatprep.subr.bf16.mxu0 0
    %1606 = vmatpush1.bf16.msra.mxu0 %v1583
    %1607 = vmatprep.subr.bf16.mxu0 0
    %1608 = vmatpush1.bf16.msra.mxu0 %v1584
    %1609 = vmatprep.subr.bf16.mxu0 0
    %1610 = vmatpush1.bf16.msra.mxu0 0
    %1611 = vmatprep.subr.bf16.mxu0 0
    %1612 = vmatpush1.bf16.msra.mxu0 0
    %1613 = vmatprep.subr.bf16.mxu0 0
    %1614 = vmatpush1.bf16.msra.mxu0 0
    %1615 = vmatprep.subr.bf16.mxu0 0
    %1616 = vmatpush1.bf16.msra.mxu0 0
    %1617 = vmatprep.subr.bf16.mxu0 0
    %1618 = vmatpush1.bf16.msra.mxu0 0
    %1619 = vmatprep.subr.bf16.mxu0 0
    %1620 = vmatpush1.bf16.msra.mxu0 0
    %1621 = vmatprep.subr.bf16.mxu0 0
    %1622 = vmatpush1.bf16.msra.mxu0 0
    %1623 = vmatprep.subr.bf16.mxu0 0
    %1624 = vmatpush1.bf16.msra.mxu0 0
    %1625 = vmatprep.mubr.bf16.mxu0 0
    %1626 = vmatmul.mubr.bf16.gmra.mrb[0].mxu0 %v1521
    %v1627 = vpop.f32.mrb[0].mxu0
    %v1628 = vadd.f32 %v1543, %v1627
    %v1629 = vpop.f32.mrb[0].mxu0
    %v1630 = vpop.f32.mrb[0].mxu0
    %v1631 = vadd.f32 %v1543, %v1630
    %v1632 = vpop.f32.mrb[0].mxu0
    %1633 = vdwg.mxu0
    %v1634 = vadd.f32 %v1391, %v1628
    %v1635 = vadd.f32 %v1392, %v1631
    %1636 = vst.msk [vmem:[#allocation10] sm:$0xff] %vm114, %v1634
    %1637 = vst.msk [vmem:[#allocation10 + $0x8] sm:$0xff] %vm114, %v1635
    // Predicated region
    $region90: #{tpu_custom_call.1} parent=1 // pred_check
      _
    $region91: #{tpu_custom_call.1} parent=1 // pred_check_branch
      %1639 = sbr.rel (0) target = $region93
    $region92: #{tpu_custom_call.1} parent=1 // pred_region
      %s1641 = ssub.s32 256, 256
      %1642 = vsyncadd [#allocation4], %s1641
      %s1643 = sshll.u32 [#allocation10], 4
      %s1644 = int_to_ptr.vmem [resolvable:$true] %s1643
      %1649 = dma.vmem_to_hbm [thread:$0]  %s1644, 256, %s18, [#allocation4], 128, 128, 8
    $region93: #{tpu_custom_call.1} parent=1 // pred_fallthru
      _
    // Predicated region
    $region94: #{tpu_custom_call.1} parent=1 // pred_check
      _
    $region95: #{tpu_custom_call.1} parent=1 // pred_check_branch
      %1651 = sbr.rel (0) target = $region97
    $region96: #{tpu_custom_call.1} parent=1 // pred_region
      %1652 = dma.done [#allocation4], 256
    $region97: #{tpu_custom_call.1} parent=1 // pred_fallthru
      _
    %1653 = vsyncpa [#allocation3], 1
    %1654 = vsyncpa [#allocation6], 1
    %1655 = vsyncpa [#allocation9], 1
    %1656 = vsyncpa [#allocation4], 1

</llo_original>
